<compile_context>
chip_gen: v5e
topology: v5e:2x2
jax: 0.10.0
libtpu: 0.0.40
codegen_flags: <defaults>
</compile_context>

<pallas_src>
import jax
import jax.numpy as jnp
from jax.experimental import pallas as pl
from jax.experimental.pallas import tpu as pltpu


def _round_up(v, m):
    return (v + m - 1) // m * m


def _pack_weights_im2col(w, c_pad):
    """(CO, CI, K, K) -> (c_pad, K*K*c_pad) with [co, (ky*K+kx)*c_pad + ci]."""
    CO, CI, K, _ = w.shape
    # w_r[idx, ci, co] = w[co, ci, ky, kx],  idx = ky*K + kx
    w_r = jnp.transpose(w, (2, 3, 1, 0)).reshape(K * K, CI, CO).astype(jnp.float32)
    w_r = jnp.pad(w_r, ((0, 0), (0, c_pad - CI), (0, c_pad - CO)))
    # -> (c_pad, K*K, c_pad) -> (c_pad, K*K*c_pad)
    return jnp.transpose(w_r, (2, 0, 1)).reshape(c_pad, K * K * c_pad)


def _make_fused_kernel(K, W_img, C_pad, HWID, OWID):
    """Fused conv1+ReLU -> conv2+ReLU on flattened, lane-dense activations.

    Ref shapes:
      x_ref : (C_pad, XWID)          f32  flat input  x_flat[c, n*H*W + r*W + col]
      w*_ref: (C_pad, K*K*C_pad)     f32  im2col-packed weights
      b*_ref: (C_pad, 1)             f32
      o_ref : (C_pad, OWID)          f32  flat conv2 output slab
      im_ref: (K*K*C_pad, HWID)      f32  scratch: im2col slab (reused by both layers)
      h_ref : (C_pad, HWID)          f32  scratch: flat conv1 activations
    """

    def kernel(x_ref, w1_ref, b1_ref, w2_ref, b2_ref, o_ref, im_ref, h_ref):
        # ---- layer 1: build (128, HWID) im2col slab, one 128-deep MXU matmul ----
        for ky in range(K):
            for kx in range(K):
                s = ky * W_img + kx                 # flat-pixel shift of this tap
                r = (ky * K + kx) * C_pad           # sublane-aligned slab row
                im_ref[r:r + C_pad, :] = x_ref[:, s:s + HWID]
        h = jnp.dot(w1_ref[...], im_ref[...], preferred_element_type=jnp.float32)
        h_ref[...] = jnp.maximum(h + b1_ref[...], 0.0)

        # ---- layer 2: same, reading the conv1 activations ----
        for ky in range(K):
            for kx in range(K):
                s = ky * W_img + kx
                r = (ky * K + kx) * C_pad
                im_ref[r:r + C_pad, :OWID] = h_ref[:, s:s + OWID]
        out = jnp.dot(w2_ref[...], im_ref[:, :OWID], preferred_element_type=jnp.float32)
        o_ref[...] = jnp.maximum(out + b2_ref[...], 0.0).astype(o_ref.dtype)

    return kernel


def make_conv_model_forward(w1, b1, w2, b2, *, c_pad=8):
    """Pack the Conv2d weights once ("module init") and return a jitted
    forward(x) = relu(conv2(relu(conv1(x)))), stride 1, no padding (VALID)."""
    CO1, CI1, K, Kb = w1.shape
    CO2, CI2, Kc, Kd = w2.shape
    assert K == Kb == Kc == Kd and CI2 == CO1
    assert max(CO1, CI1, CO2, CI2) <= c_pad

    # One-time packing: hoisted out of the per-call path (weights are static).
    w1p = _pack_weights_im2col(w1, c_pad)                                     # (8, 128)
    w2p = _pack_weights_im2col(w2, c_pad)                                     # (8, 128)
    b1p = jnp.pad(jnp.asarray(b1, jnp.float32).reshape(CO1, 1),
                  ((0, c_pad - CO1), (0, 0)))
    b2p = jnp.pad(jnp.asarray(b2, jnp.float32).reshape(CO2, 1),
                  ((0, c_pad - CO2), (0, 0)))

    @jax.jit
    def forward(x):
        N, CI, H, W = x.shape
        assert CI == CI1
        OH, OW = H - 2 * (K - 1), W - 2 * (K - 1)
        P = H * W
        max_shift = (K - 1) * W + (K - 1)
        OWID = _round_up(N * P, 128)                 # conv2 output slab width
        HWID = _round_up(OWID + max_shift, 128)      # conv1 output slab width
        XWID = _round_up(HWID + max_shift, 128)      # padded flat-input width

        # Flatten activations: x_flat[c, n*P + r*W + col] = x[n, c, r, col]
        x_flat = jnp.transpose(x, (1, 0, 2, 3)).reshape(CI, N * P).astype(jnp.float32)
        x_flat = jnp.pad(x_flat, ((0, c_pad - CI), (0, XWID - N * P)))

        kernel = _make_fused_kernel(K, W, c_pad, HWID, OWID)

        out_slab = pl.pallas_call(
            kernel,
            out_shape=jax.ShapeDtypeStruct((c_pad, OWID), x.dtype),
            in_specs=[pl.BlockSpec(memory_space=pltpu.MemorySpace.VMEM)] * 5,
            out_specs=pl.BlockSpec(memory_space=pltpu.MemorySpace.VMEM),
            scratch_shapes=[
                pltpu.VMEM((K * K * c_pad, HWID), jnp.float32),   # im2col slab
                pltpu.VMEM((c_pad, HWID), jnp.float32),           # conv1 activations
            ],
        )(x_flat, w1p, b1p, w2p, b2p)

        # Un-flatten (layout plumbing outside the kernel): valid conv2 outputs
        # live at flat positions n*P + r*W + col with r < OH, col < OW.
        out = out_slab[:CO2, :N * P].reshape(CO2, N, H, W)[:, :, :OH, :OW]
        return jnp.transpose(out, (1, 0, 2, 3))

    return forward


def _ref_conv_relu(x, w, b):
    out = jax.lax.conv_general_dilated(
        x, w, window_strides=(1, 1), padding="VALID",
        dimension_numbers=("NCHW", "OIHW", "NCHW"),
        precision=jax.lax.Precision.HIGHEST)
    return jnp.maximum(out + b[None, :, None, None], 0.0)


if __name__ == "__main__":
    key = jax.random.PRNGKey(0)
    kx, k1w, k1b, k2w, k2b = jax.random.split(key, 5)

    # Small shapes consistent with the module: Conv2d(4, 4, 4) twice -> NCHW (2, 4, 16, 16).
    N, C, H, W = 2, 4, 16, 16
    K = 4

    x = jax.random.normal(kx, (N, C, H, W), dtype=jnp.float32)

    # Deterministic PyTorch-style uniform(-1/sqrt(fan_in), +) init.
    fan_in = C * K * K
    bound = 1.0 / (fan_in ** 0.5)
    w1 = jax.random.uniform(k1w, (4, 4, K, K), jnp.float32, -bound, bound)
    b1 = jax.random.uniform(k1b, (4,), jnp.float32, -bound, bound)
    w2 = jax.random.uniform(k2w, (4, 4, K, K), jnp.float32, -bound, bound)
    b2 = jax.random.uniform(k2b, (4,), jnp.float32, -bound, bound)

    forward = make_conv_model_forward(w1, b1, w2, b2)
    y = jax.block_until_ready(forward(x))

    # Verify against the XLA reference conv (f32, HIGHEST precision).
    y_ref = _ref_conv_relu(_ref_conv_relu(x, w1, b1), w2, b2)
    assert y.shape == (N, 4, H - 2 * (K - 1), W - 2 * (K - 1)), y.shape
    err = float(jnp.max(jnp.abs(y - y_ref)))
    # Kernel matmuls use default (single-pass bf16) MXU precision -> allow
    # bf16-level tolerance against the f32 reference.
    assert err < 2e-2, err

    print("KERNEL_OK")
</pallas_src>

<mosaic_0001>
module attributes {stable_mosaic.version = 11 : i64} {
  func.func @kernel(%arg0: memref<8x768xf32, #tpu.memory_space<vmem>>, %arg1: memref<8x128xf32, #tpu.memory_space<vmem>>, %arg2: memref<8x1xf32, #tpu.memory_space<vmem>>, %arg3: memref<8x128xf32, #tpu.memory_space<vmem>>, %arg4: memref<8x1xf32, #tpu.memory_space<vmem>>, %arg5: memref<8x512xf32, #tpu.memory_space<vmem>>, %arg6: memref<128x640xf32, #tpu.memory_space<vmem>>, %arg7: memref<8x640xf32, #tpu.memory_space<vmem>>) attributes {dimension_semantics = [], scalar_prefetch = 0 : i64, scratch_operands = 2 : i64, tpu.core_type = #tpu.core_type<tc>} {
    %c0 = arith.constant 0 : index
    %c0_0 = arith.constant 0 : index
    %0 = vector.load %arg0[%c0, %c0_0] : memref<8x768xf32, #tpu.memory_space<vmem>>, vector<8x640xf32>
    %c0_1 = arith.constant 0 : index
    %c0_2 = arith.constant 0 : index
    %1 = vector.load %arg6[%c0_1, %c0_2] : memref<128x640xf32, #tpu.memory_space<vmem>>, vector<8x640xf32>
    tpu.vector_store %arg6[%c0_1, %c0_2], %0 {strides = array<i32>} : memref<128x640xf32, #tpu.memory_space<vmem>>, vector<8x640xf32>,
    %c0_3 = arith.constant 0 : index
    %c1 = arith.constant 1 : index
    %2 = vector.load %arg0[%c0_3, %c1] : memref<8x768xf32, #tpu.memory_space<vmem>>, vector<8x640xf32>
    %c8 = arith.constant 8 : index
    %c0_4 = arith.constant 0 : index
    %3 = vector.load %arg6[%c8, %c0_4] : memref<128x640xf32, #tpu.memory_space<vmem>>, vector<8x640xf32>
    tpu.vector_store %arg6[%c8, %c0_4], %2 {strides = array<i32>} : memref<128x640xf32, #tpu.memory_space<vmem>>, vector<8x640xf32>,
    %c0_5 = arith.constant 0 : index
    %c2 = arith.constant 2 : index
    %4 = vector.load %arg0[%c0_5, %c2] : memref<8x768xf32, #tpu.memory_space<vmem>>, vector<8x640xf32>
    %c16 = arith.constant 16 : index
    %c0_6 = arith.constant 0 : index
    %5 = vector.load %arg6[%c16, %c0_6] : memref<128x640xf32, #tpu.memory_space<vmem>>, vector<8x640xf32>
    tpu.vector_store %arg6[%c16, %c0_6], %4 {strides = array<i32>} : memref<128x640xf32, #tpu.memory_space<vmem>>, vector<8x640xf32>,
    %c0_7 = arith.constant 0 : index
    %c3 = arith.constant 3 : index
    %6 = vector.load %arg0[%c0_7, %c3] : memref<8x768xf32, #tpu.memory_space<vmem>>, vector<8x640xf32>
    %c24 = arith.constant 24 : index
    %c0_8 = arith.constant 0 : index
    %7 = vector.load %arg6[%c24, %c0_8] : memref<128x640xf32, #tpu.memory_space<vmem>>, vector<8x640xf32>
    tpu.vector_store %arg6[%c24, %c0_8], %6 {strides = array<i32>} : memref<128x640xf32, #tpu.memory_space<vmem>>, vector<8x640xf32>,
    %c0_9 = arith.constant 0 : index
    %c16_10 = arith.constant 16 : index
    %8 = vector.load %arg0[%c0_9, %c16_10] : memref<8x768xf32, #tpu.memory_space<vmem>>, vector<8x640xf32>
    %c32 = arith.constant 32 : index
    %c0_11 = arith.constant 0 : index
    %9 = vector.load %arg6[%c32, %c0_11] : memref<128x640xf32, #tpu.memory_space<vmem>>, vector<8x640xf32>
    tpu.vector_store %arg6[%c32, %c0_11], %8 {strides = array<i32>} : memref<128x640xf32, #tpu.memory_space<vmem>>, vector<8x640xf32>,
    %c0_12 = arith.constant 0 : index
    %c17 = arith.constant 17 : index
    %10 = vector.load %arg0[%c0_12, %c17] : memref<8x768xf32, #tpu.memory_space<vmem>>, vector<8x640xf32>
    %c40 = arith.constant 40 : index
    %c0_13 = arith.constant 0 : index
    %11 = vector.load %arg6[%c40, %c0_13] : memref<128x640xf32, #tpu.memory_space<vmem>>, vector<8x640xf32>
    tpu.vector_store %arg6[%c40, %c0_13], %10 {strides = array<i32>} : memref<128x640xf32, #tpu.memory_space<vmem>>, vector<8x640xf32>,
    %c0_14 = arith.constant 0 : index
    %c18 = arith.constant 18 : index
    %12 = vector.load %arg0[%c0_14, %c18] : memref<8x768xf32, #tpu.memory_space<vmem>>, vector<8x640xf32>
    %c48 = arith.constant 48 : index
    %c0_15 = arith.constant 0 : index
    %13 = vector.load %arg6[%c48, %c0_15] : memref<128x640xf32, #tpu.memory_space<vmem>>, vector<8x640xf32>
    tpu.vector_store %arg6[%c48, %c0_15], %12 {strides = array<i32>} : memref<128x640xf32, #tpu.memory_space<vmem>>, vector<8x640xf32>,
    %c0_16 = arith.constant 0 : index
    %c19 = arith.constant 19 : index
    %14 = vector.load %arg0[%c0_16, %c19] : memref<8x768xf32, #tpu.memory_space<vmem>>, vector<8x640xf32>
    %c56 = arith.constant 56 : index
    %c0_17 = arith.constant 0 : index
    %15 = vector.load %arg6[%c56, %c0_17] : memref<128x640xf32, #tpu.memory_space<vmem>>, vector<8x640xf32>
    tpu.vector_store %arg6[%c56, %c0_17], %14 {strides = array<i32>} : memref<128x640xf32, #tpu.memory_space<vmem>>, vector<8x640xf32>,
    %c0_18 = arith.constant 0 : index
    %c32_19 = arith.constant 32 : index
    %16 = vector.load %arg0[%c0_18, %c32_19] : memref<8x768xf32, #tpu.memory_space<vmem>>, vector<8x640xf32>
    %c64 = arith.constant 64 : index
    %c0_20 = arith.constant 0 : index
    %17 = vector.load %arg6[%c64, %c0_20] : memref<128x640xf32, #tpu.memory_space<vmem>>, vector<8x640xf32>
    tpu.vector_store %arg6[%c64, %c0_20], %16 {strides = array<i32>} : memref<128x640xf32, #tpu.memory_space<vmem>>, vector<8x640xf32>,
    %c0_21 = arith.constant 0 : index
    %c33 = arith.constant 33 : index
    %18 = vector.load %arg0[%c0_21, %c33] : memref<8x768xf32, #tpu.memory_space<vmem>>, vector<8x640xf32>
    %c72 = arith.constant 72 : index
    %c0_22 = arith.constant 0 : index
    %19 = vector.load %arg6[%c72, %c0_22] : memref<128x640xf32, #tpu.memory_space<vmem>>, vector<8x640xf32>
    tpu.vector_store %arg6[%c72, %c0_22], %18 {strides = array<i32>} : memref<128x640xf32, #tpu.memory_space<vmem>>, vector<8x640xf32>,
    %c0_23 = arith.constant 0 : index
    %c34 = arith.constant 34 : index
    %20 = vector.load %arg0[%c0_23, %c34] : memref<8x768xf32, #tpu.memory_space<vmem>>, vector<8x640xf32>
    %c80 = arith.constant 80 : index
    %c0_24 = arith.constant 0 : index
    %21 = vector.load %arg6[%c80, %c0_24] : memref<128x640xf32, #tpu.memory_space<vmem>>, vector<8x640xf32>
    tpu.vector_store %arg6[%c80, %c0_24], %20 {strides = array<i32>} : memref<128x640xf32, #tpu.memory_space<vmem>>, vector<8x640xf32>,
    %c0_25 = arith.constant 0 : index
    %c35 = arith.constant 35 : index
    %22 = vector.load %arg0[%c0_25, %c35] : memref<8x768xf32, #tpu.memory_space<vmem>>, vector<8x640xf32>
    %c88 = arith.constant 88 : index
    %c0_26 = arith.constant 0 : index
    %23 = vector.load %arg6[%c88, %c0_26] : memref<128x640xf32, #tpu.memory_space<vmem>>, vector<8x640xf32>
    tpu.vector_store %arg6[%c88, %c0_26], %22 {strides = array<i32>} : memref<128x640xf32, #tpu.memory_space<vmem>>, vector<8x640xf32>,
    %c0_27 = arith.constant 0 : index
    %c48_28 = arith.constant 48 : index
    %24 = vector.load %arg0[%c0_27, %c48_28] : memref<8x768xf32, #tpu.memory_space<vmem>>, vector<8x640xf32>
    %c96 = arith.constant 96 : index
    %c0_29 = arith.constant 0 : index
    %25 = vector.load %arg6[%c96, %c0_29] : memref<128x640xf32, #tpu.memory_space<vmem>>, vector<8x640xf32>
    tpu.vector_store %arg6[%c96, %c0_29], %24 {strides = array<i32>} : memref<128x640xf32, #tpu.memory_space<vmem>>, vector<8x640xf32>,
    %c0_30 = arith.constant 0 : index
    %c49 = arith.constant 49 : index
    %26 = vector.load %arg0[%c0_30, %c49] : memref<8x768xf32, #tpu.memory_space<vmem>>, vector<8x640xf32>
    %c104 = arith.constant 104 : index
    %c0_31 = arith.constant 0 : index
    %27 = vector.load %arg6[%c104, %c0_31] : memref<128x640xf32, #tpu.memory_space<vmem>>, vector<8x640xf32>
    tpu.vector_store %arg6[%c104, %c0_31], %26 {strides = array<i32>} : memref<128x640xf32, #tpu.memory_space<vmem>>, vector<8x640xf32>,
    %c0_32 = arith.constant 0 : index
    %c50 = arith.constant 50 : index
    %28 = vector.load %arg0[%c0_32, %c50] : memref<8x768xf32, #tpu.memory_space<vmem>>, vector<8x640xf32>
    %c112 = arith.constant 112 : index
    %c0_33 = arith.constant 0 : index
    %29 = vector.load %arg6[%c112, %c0_33] : memref<128x640xf32, #tpu.memory_space<vmem>>, vector<8x640xf32>
    tpu.vector_store %arg6[%c112, %c0_33], %28 {strides = array<i32>} : memref<128x640xf32, #tpu.memory_space<vmem>>, vector<8x640xf32>,
    %c0_34 = arith.constant 0 : index
    %c51 = arith.constant 51 : index
    %30 = vector.load %arg0[%c0_34, %c51] : memref<8x768xf32, #tpu.memory_space<vmem>>, vector<8x640xf32>
    %c120 = arith.constant 120 : index
    %c0_35 = arith.constant 0 : index
    %31 = vector.load %arg6[%c120, %c0_35] : memref<128x640xf32, #tpu.memory_space<vmem>>, vector<8x640xf32>
    tpu.vector_store %arg6[%c120, %c0_35], %30 {strides = array<i32>} : memref<128x640xf32, #tpu.memory_space<vmem>>, vector<8x640xf32>,
    %c0_36 = arith.constant 0 : index
    %c0_37 = arith.constant 0 : index
    %32 = vector.load %arg1[%c0_36, %c0_37] : memref<8x128xf32, #tpu.memory_space<vmem>>, vector<8x128xf32>
    %c0_38 = arith.constant 0 : index
    %c0_39 = arith.constant 0 : index
    %33 = vector.load %arg6[%c0_38, %c0_39] : memref<128x640xf32, #tpu.memory_space<vmem>>, vector<128x640xf32>
    %cst = arith.constant dense<0.000000e+00> : vector<8x640xf32>
    %34 = tpu.matmul %32, %33, %cst {dimension_numbers = #tpu.dot_dimension_numbers<[1], [0], [0], [1], [0, 0, 1, 1], [], []>} : vector<8x128xf32>, vector<128x640xf32>, vector<8x640xf32> -> vector<8x640xf32>
    %c0_40 = arith.constant 0 : index
    %c0_41 = arith.constant 0 : index
    %35 = vector.load %arg2[%c0_40, %c0_41] : memref<8x1xf32, #tpu.memory_space<vmem>>, vector<8x1xf32>
    %36 = vector.broadcast %35 : vector<8x1xf32> to vector<8x640xf32>
    %37 = arith.addf %34, %36 : vector<8x640xf32>
    %cst_42 = arith.constant 0.000000e+00 : f32
    %38 = vector.broadcast %cst_42 : f32 to vector<8x640xf32>
    %39 = arith.maximumf %37, %38 : vector<8x640xf32>
    %c0_43 = arith.constant 0 : index
    %c0_44 = arith.constant 0 : index
    %40 = vector.load %arg7[%c0_43, %c0_44] : memref<8x640xf32, #tpu.memory_space<vmem>>, vector<8x640xf32>
    tpu.vector_store %arg7[%c0_43, %c0_44], %39 {strides = array<i32>} : memref<8x640xf32, #tpu.memory_space<vmem>>, vector<8x640xf32>,
    %c0_45 = arith.constant 0 : index
    %c0_46 = arith.constant 0 : index
    %41 = vector.load %arg7[%c0_45, %c0_46] : memref<8x640xf32, #tpu.memory_space<vmem>>, vector<8x512xf32>
    %c0_47 = arith.constant 0 : index
    %c0_48 = arith.constant 0 : index
    %42 = vector.load %arg6[%c0_47, %c0_48] : memref<128x640xf32, #tpu.memory_space<vmem>>, vector<8x512xf32>
    tpu.vector_store %arg6[%c0_47, %c0_48], %41 {strides = array<i32>} : memref<128x640xf32, #tpu.memory_space<vmem>>, vector<8x512xf32>,
    %c0_49 = arith.constant 0 : index
    %c1_50 = arith.constant 1 : index
    %43 = vector.load %arg7[%c0_49, %c1_50] : memref<8x640xf32, #tpu.memory_space<vmem>>, vector<8x512xf32>
    %c8_51 = arith.constant 8 : index
    %c0_52 = arith.constant 0 : index
    %44 = vector.load %arg6[%c8_51, %c0_52] : memref<128x640xf32, #tpu.memory_space<vmem>>, vector<8x512xf32>
    tpu.vector_store %arg6[%c8_51, %c0_52], %43 {strides = array<i32>} : memref<128x640xf32, #tpu.memory_space<vmem>>, vector<8x512xf32>,
    %c0_53 = arith.constant 0 : index
    %c2_54 = arith.constant 2 : index
    %45 = vector.load %arg7[%c0_53, %c2_54] : memref<8x640xf32, #tpu.memory_space<vmem>>, vector<8x512xf32>
    %c16_55 = arith.constant 16 : index
    %c0_56 = arith.constant 0 : index
    %46 = vector.load %arg6[%c16_55, %c0_56] : memref<128x640xf32, #tpu.memory_space<vmem>>, vector<8x512xf32>
    tpu.vector_store %arg6[%c16_55, %c0_56], %45 {strides = array<i32>} : memref<128x640xf32, #tpu.memory_space<vmem>>, vector<8x512xf32>,
    %c0_57 = arith.constant 0 : index
    %c3_58 = arith.constant 3 : index
    %47 = vector.load %arg7[%c0_57, %c3_58] : memref<8x640xf32, #tpu.memory_space<vmem>>, vector<8x512xf32>
    %c24_59 = arith.constant 24 : index
    %c0_60 = arith.constant 0 : index
    %48 = vector.load %arg6[%c24_59, %c0_60] : memref<128x640xf32, #tpu.memory_space<vmem>>, vector<8x512xf32>
    tpu.vector_store %arg6[%c24_59, %c0_60], %47 {strides = array<i32>} : memref<128x640xf32, #tpu.memory_space<vmem>>, vector<8x512xf32>,
    %c0_61 = arith.constant 0 : index
    %c16_62 = arith.constant 16 : index
    %49 = vector.load %arg7[%c0_61, %c16_62] : memref<8x640xf32, #tpu.memory_space<vmem>>, vector<8x512xf32>
    %c32_63 = arith.constant 32 : index
    %c0_64 = arith.constant 0 : index
    %50 = vector.load %arg6[%c32_63, %c0_64] : memref<128x640xf32, #tpu.memory_space<vmem>>, vector<8x512xf32>
    tpu.vector_store %arg6[%c32_63, %c0_64], %49 {strides = array<i32>} : memref<128x640xf32, #tpu.memory_space<vmem>>, vector<8x512xf32>,
    %c0_65 = arith.constant 0 : index
    %c17_66 = arith.constant 17 : index
    %51 = vector.load %arg7[%c0_65, %c17_66] : memref<8x640xf32, #tpu.memory_space<vmem>>, vector<8x512xf32>
    %c40_67 = arith.constant 40 : index
    %c0_68 = arith.constant 0 : index
    %52 = vector.load %arg6[%c40_67, %c0_68] : memref<128x640xf32, #tpu.memory_space<vmem>>, vector<8x512xf32>
    tpu.vector_store %arg6[%c40_67, %c0_68], %51 {strides = array<i32>} : memref<128x640xf32, #tpu.memory_space<vmem>>, vector<8x512xf32>,
    %c0_69 = arith.constant 0 : index
    %c18_70 = arith.constant 18 : index
    %53 = vector.load %arg7[%c0_69, %c18_70] : memref<8x640xf32, #tpu.memory_space<vmem>>, vector<8x512xf32>
    %c48_71 = arith.constant 48 : index
    %c0_72 = arith.constant 0 : index
    %54 = vector.load %arg6[%c48_71, %c0_72] : memref<128x640xf32, #tpu.memory_space<vmem>>, vector<8x512xf32>
    tpu.vector_store %arg6[%c48_71, %c0_72], %53 {strides = array<i32>} : memref<128x640xf32, #tpu.memory_space<vmem>>, vector<8x512xf32>,
    %c0_73 = arith.constant 0 : index
    %c19_74 = arith.constant 19 : index
    %55 = vector.load %arg7[%c0_73, %c19_74] : memref<8x640xf32, #tpu.memory_space<vmem>>, vector<8x512xf32>
    %c56_75 = arith.constant 56 : index
    %c0_76 = arith.constant 0 : index
    %56 = vector.load %arg6[%c56_75, %c0_76] : memref<128x640xf32, #tpu.memory_space<vmem>>, vector<8x512xf32>
    tpu.vector_store %arg6[%c56_75, %c0_76], %55 {strides = array<i32>} : memref<128x640xf32, #tpu.memory_space<vmem>>, vector<8x512xf32>,
    %c0_77 = arith.constant 0 : index
    %c32_78 = arith.constant 32 : index
    %57 = vector.load %arg7[%c0_77, %c32_78] : memref<8x640xf32, #tpu.memory_space<vmem>>, vector<8x512xf32>
    %c64_79 = arith.constant 64 : index
    %c0_80 = arith.constant 0 : index
    %58 = vector.load %arg6[%c64_79, %c0_80] : memref<128x640xf32, #tpu.memory_space<vmem>>, vector<8x512xf32>
    tpu.vector_store %arg6[%c64_79, %c0_80], %57 {strides = array<i32>} : memref<128x640xf32, #tpu.memory_space<vmem>>, vector<8x512xf32>,
    %c0_81 = arith.constant 0 : index
    %c33_82 = arith.constant 33 : index
    %59 = vector.load %arg7[%c0_81, %c33_82] : memref<8x640xf32, #tpu.memory_space<vmem>>, vector<8x512xf32>
    %c72_83 = arith.constant 72 : index
    %c0_84 = arith.constant 0 : index
    %60 = vector.load %arg6[%c72_83, %c0_84] : memref<128x640xf32, #tpu.memory_space<vmem>>, vector<8x512xf32>
    tpu.vector_store %arg6[%c72_83, %c0_84], %59 {strides = array<i32>} : memref<128x640xf32, #tpu.memory_space<vmem>>, vector<8x512xf32>,
    %c0_85 = arith.constant 0 : index
    %c34_86 = arith.constant 34 : index
    %61 = vector.load %arg7[%c0_85, %c34_86] : memref<8x640xf32, #tpu.memory_space<vmem>>, vector<8x512xf32>
    %c80_87 = arith.constant 80 : index
    %c0_88 = arith.constant 0 : index
    %62 = vector.load %arg6[%c80_87, %c0_88] : memref<128x640xf32, #tpu.memory_space<vmem>>, vector<8x512xf32>
    tpu.vector_store %arg6[%c80_87, %c0_88], %61 {strides = array<i32>} : memref<128x640xf32, #tpu.memory_space<vmem>>, vector<8x512xf32>,
    %c0_89 = arith.constant 0 : index
    %c35_90 = arith.constant 35 : index
    %63 = vector.load %arg7[%c0_89, %c35_90] : memref<8x640xf32, #tpu.memory_space<vmem>>, vector<8x512xf32>
    %c88_91 = arith.constant 88 : index
    %c0_92 = arith.constant 0 : index
    %64 = vector.load %arg6[%c88_91, %c0_92] : memref<128x640xf32, #tpu.memory_space<vmem>>, vector<8x512xf32>
    tpu.vector_store %arg6[%c88_91, %c0_92], %63 {strides = array<i32>} : memref<128x640xf32, #tpu.memory_space<vmem>>, vector<8x512xf32>,
    %c0_93 = arith.constant 0 : index
    %c48_94 = arith.constant 48 : index
    %65 = vector.load %arg7[%c0_93, %c48_94] : memref<8x640xf32, #tpu.memory_space<vmem>>, vector<8x512xf32>
    %c96_95 = arith.constant 96 : index
    %c0_96 = arith.constant 0 : index
    %66 = vector.load %arg6[%c96_95, %c0_96] : memref<128x640xf32, #tpu.memory_space<vmem>>, vector<8x512xf32>
    tpu.vector_store %arg6[%c96_95, %c0_96], %65 {strides = array<i32>} : memref<128x640xf32, #tpu.memory_space<vmem>>, vector<8x512xf32>,
    %c0_97 = arith.constant 0 : index
    %c49_98 = arith.constant 49 : index
    %67 = vector.load %arg7[%c0_97, %c49_98] : memref<8x640xf32, #tpu.memory_space<vmem>>, vector<8x512xf32>
    %c104_99 = arith.constant 104 : index
    %c0_100 = arith.constant 0 : index
    %68 = vector.load %arg6[%c104_99, %c0_100] : memref<128x640xf32, #tpu.memory_space<vmem>>, vector<8x512xf32>
    tpu.vector_store %arg6[%c104_99, %c0_100], %67 {strides = array<i32>} : memref<128x640xf32, #tpu.memory_space<vmem>>, vector<8x512xf32>,
    %c0_101 = arith.constant 0 : index
    %c50_102 = arith.constant 50 : index
    %69 = vector.load %arg7[%c0_101, %c50_102] : memref<8x640xf32, #tpu.memory_space<vmem>>, vector<8x512xf32>
    %c112_103 = arith.constant 112 : index
    %c0_104 = arith.constant 0 : index
    %70 = vector.load %arg6[%c112_103, %c0_104] : memref<128x640xf32, #tpu.memory_space<vmem>>, vector<8x512xf32>
    tpu.vector_store %arg6[%c112_103, %c0_104], %69 {strides = array<i32>} : memref<128x640xf32, #tpu.memory_space<vmem>>, vector<8x512xf32>,
    %c0_105 = arith.constant 0 : index
    %c51_106 = arith.constant 51 : index
    %71 = vector.load %arg7[%c0_105, %c51_106] : memref<8x640xf32, #tpu.memory_space<vmem>>, vector<8x512xf32>
    %c120_107 = arith.constant 120 : index
    %c0_108 = arith.constant 0 : index
    %72 = vector.load %arg6[%c120_107, %c0_108] : memref<128x640xf32, #tpu.memory_space<vmem>>, vector<8x512xf32>
    tpu.vector_store %arg6[%c120_107, %c0_108], %71 {strides = array<i32>} : memref<128x640xf32, #tpu.memory_space<vmem>>, vector<8x512xf32>,
    %c0_109 = arith.constant 0 : index
    %c0_110 = arith.constant 0 : index
    %73 = vector.load %arg3[%c0_109, %c0_110] : memref<8x128xf32, #tpu.memory_space<vmem>>, vector<8x128xf32>
    %c0_111 = arith.constant 0 : index
    %c0_112 = arith.constant 0 : index
    %74 = vector.load %arg6[%c0_111, %c0_112] : memref<128x640xf32, #tpu.memory_space<vmem>>, vector<128x512xf32>
    %cst_113 = arith.constant dense<0.000000e+00> : vector<8x512xf32>
    %75 = tpu.matmul %73, %74, %cst_113 {dimension_numbers = #tpu.dot_dimension_numbers<[1], [0], [0], [1], [0, 0, 1, 1], [], []>} : vector<8x128xf32>, vector<128x512xf32>, vector<8x512xf32> -> vector<8x512xf32>
    %c0_114 = arith.constant 0 : index
    %c0_115 = arith.constant 0 : index
    %76 = vector.load %arg4[%c0_114, %c0_115] : memref<8x1xf32, #tpu.memory_space<vmem>>, vector<8x1xf32>
    %77 = vector.broadcast %76 : vector<8x1xf32> to vector<8x512xf32>
    %78 = arith.addf %75, %77 : vector<8x512xf32>
    %cst_116 = arith.constant 0.000000e+00 : f32
    %79 = vector.broadcast %cst_116 : f32 to vector<8x512xf32>
    %80 = arith.maximumf %78, %79 : vector<8x512xf32>
    %c0_117 = arith.constant 0 : index
    %c0_118 = arith.constant 0 : index
    %81 = vector.load %arg5[%c0_117, %c0_118] : memref<8x512xf32, #tpu.memory_space<vmem>>, vector<8x512xf32>
    tpu.vector_store %arg5[%c0_117, %c0_118], %80 {strides = array<i32>} : memref<8x512xf32, #tpu.memory_space<vmem>>, vector<8x512xf32>,
    return
  }
}

</mosaic_0001>

<llo_original>
// kernel: forward.1
$region0: #{forward.1}
  #allocation0 [shape = 'u32[]', space=smem, size = 0x4, offset = 0x4, fixed_abs, tag = 'smem constant byte address 0x4 - core index']
  #allocation1 [shape = 'u32[72,128]{1,0:T(1,128)}', space=vmem, size = 0x9000, scoped, tag = 'internal scratch']
  #allocation2 [shape = 'f32[128,640]{1,0:T(8,128)}', space=vmem, size = 0x50000, scoped, tag = 'scratch operand']
  #allocation3 [shape = 'f32[8,640]{1,0:T(8,128)}', space=vmem, size = 0x5000, scoped, tag = 'scratch operand']
  %s0 = inlined_call_operand.vmem [shape: f32[8,768], index: 0, kind: input, shape index: {}]
  %s1 = inlined_call_operand.vmem [shape: f32[8,128], index: 1, kind: input, shape index: {}]
  %s2 = inlined_call_operand.vmem [shape: f32[8,1], index: 2, kind: input, shape index: {}]
  %s3 = inlined_call_operand.vmem [shape: f32[8,128], index: 3, kind: input, shape index: {}]
  %s4 = inlined_call_operand.vmem [shape: f32[8,1], index: 4, kind: input, shape index: {}]
  %s5 = inlined_call_operand.vmem [shape: f32[8,512], index: 5, kind: output, shape index: {}]
  %s6 = sld [smem:[#allocation0]]
  $region30: #{forward.1} parent=0
    _
  %s8 = ssub.s32 1, %s6
  %s9 = scalar_select 0, %s8, %s6
  // Predicated region
  $region2: #{forward.1} parent=0 // pred_check
    _
  $region3: #{forward.1} parent=0 // pred_check_branch
    %11 = sbr.rel (0) target = $region5
  $region4: #{forward.1} parent=0 // pred_region
    _
  $region5: #{forward.1} parent=0 // pred_fallthru
    _
  // Predicated region
  $region6: #{forward.1} parent=0 // pred_check
    _
  $region7: #{forward.1} parent=0 // pred_check_branch
    %13 = sbr.rel (0) target = $region9
  $region8: #{forward.1} parent=0 // pred_region
    _
  $region9: #{forward.1} parent=0 // pred_fallthru
    _
  // Predicated region
  $region10: #{forward.1} parent=0 // pred_check
    _
  $region11: #{forward.1} parent=0 // pred_check_branch
    %15 = sbr.rel (0) target = $region13
  $region12: #{forward.1} parent=0 // pred_region
    _
  $region13: #{forward.1} parent=0 // pred_fallthru
    _
  // Predicated region
  $region14: #{forward.1} parent=0 // pred_check
    _
  $region15: #{forward.1} parent=0 // pred_check_branch
    %17 = sbr.rel (0) target = $region17
  $region16: #{forward.1} parent=0 // pred_region
    _
  $region17: #{forward.1} parent=0 // pred_fallthru
    _
  // Predicated region
  $region18: #{forward.1} parent=0 // pred_check
    _
  $region19: #{forward.1} parent=0 // pred_check_branch
    %19 = sbr.rel (0) target = $region21
  $region20: #{forward.1} parent=0 // pred_region
    _
  $region21: #{forward.1} parent=0 // pred_fallthru
    _
  %v20 = vld [vmem:[%s0] sm:$0xff]
  %v21 = vld [vmem:[%s0 + $0x8] sm:$0xff]
  %v22 = vld [vmem:[%s0 + $0x10] sm:$0xff]
  %v23 = vld [vmem:[%s0 + $0x18] sm:$0xff]
  %v24 = vld [vmem:[%s0 + $0x20] sm:$0xff]
  %25 = vst [vmem:[#allocation2] sm:$0xff] %v20
  %26 = vst [vmem:[#allocation2 + $0x8] sm:$0xff] %v21
  %27 = vst [vmem:[#allocation2 + $0x10] sm:$0xff] %v22
  %28 = vst [vmem:[#allocation2 + $0x18] sm:$0xff] %v23
  %29 = vst [vmem:[#allocation2 + $0x20] sm:$0xff] %v24
  %v30 = vld [vmem:[%s0] sm:$0xff]
  %v31 = vld [vmem:[%s0 + $0x8] sm:$0xff]
  %v32 = vld [vmem:[%s0 + $0x10] sm:$0xff]
  %v33 = vld [vmem:[%s0 + $0x18] sm:$0xff]
  %v34 = vld [vmem:[%s0 + $0x20] sm:$0xff]
  %v35 = vld [vmem:[%s0 + $0x28] sm:$0xff]
  %42 = vrot.lane.b32.xlu0 %v30, 127
  %v43 = vpop.permute.xlu0 %42
  %44 = vrot.lane.b32.xlu0 %v31, 127
  %v45 = vpop.permute.xlu0 %44
  %46 = vrot.lane.b32.xlu0 %v32, 127
  %v47 = vpop.permute.xlu0 %46
  %48 = vrot.lane.b32.xlu0 %v33, 127
  %v49 = vpop.permute.xlu0 %48
  %50 = vrot.lane.b32.xlu0 %v34, 127
  %v51 = vpop.permute.xlu0 %50
  %52 = vrot.lane.b32.xlu0 %v35, 127
  %v53 = vpop.permute.xlu0 %52
  %vm54 = vcmask 1039360
  %v55 = vsel %vm54, %v43, %v45
  %v56 = vsel %vm54, %v45, %v47
  %v57 = vsel %vm54, %v47, %v49
  %v58 = vsel %vm54, %v49, %v51
  %v59 = vsel %vm54, %v51, %v53
  %65 = vst [vmem:[#allocation2 + $0x28] sm:$0xff] %v55
  %66 = vst [vmem:[#allocation2 + $0x30] sm:$0xff] %v56
  %67 = vst [vmem:[#allocation2 + $0x38] sm:$0xff] %v57
  %68 = vst [vmem:[#allocation2 + $0x40] sm:$0xff] %v58
  %69 = vst [vmem:[#allocation2 + $0x48] sm:$0xff] %v59
  %v70 = vld [vmem:[%s0] sm:$0xff]
  %v71 = vld [vmem:[%s0 + $0x8] sm:$0xff]
  %v72 = vld [vmem:[%s0 + $0x10] sm:$0xff]
  %v73 = vld [vmem:[%s0 + $0x18] sm:$0xff]
  %v74 = vld [vmem:[%s0 + $0x20] sm:$0xff]
  %v75 = vld [vmem:[%s0 + $0x28] sm:$0xff]
  %82 = vrot.lane.b32.xlu0 %v70, 126
  %v83 = vpop.permute.xlu0 %82
  %84 = vrot.lane.b32.xlu0 %v71, 126
  %v85 = vpop.permute.xlu0 %84
  %86 = vrot.lane.b32.xlu0 %v72, 126
  %v87 = vpop.permute.xlu0 %86
  %88 = vrot.lane.b32.xlu0 %v73, 126
  %v89 = vpop.permute.xlu0 %88
  %90 = vrot.lane.b32.xlu0 %v74, 126
  %v91 = vpop.permute.xlu0 %90
  %92 = vrot.lane.b32.xlu0 %v75, 126
  %v93 = vpop.permute.xlu0 %92
  %vm94 = vcmask 1031168
  %v95 = vsel %vm94, %v83, %v85
  %v96 = vsel %vm94, %v85, %v87
  %v97 = vsel %vm94, %v87, %v89
  %v98 = vsel %vm94, %v89, %v91
  %v99 = vsel %vm94, %v91, %v93
  %105 = vst [vmem:[#allocation2 + $0x50] sm:$0xff] %v95
  %106 = vst [vmem:[#allocation2 + $0x58] sm:$0xff] %v96
  %107 = vst [vmem:[#allocation2 + $0x60] sm:$0xff] %v97
  %108 = vst [vmem:[#allocation2 + $0x68] sm:$0xff] %v98
  %109 = vst [vmem:[#allocation2 + $0x70] sm:$0xff] %v99
  %v110 = vld [vmem:[%s0] sm:$0xff]
  %v111 = vld [vmem:[%s0 + $0x8] sm:$0xff]
  %v112 = vld [vmem:[%s0 + $0x10] sm:$0xff]
  %v113 = vld [vmem:[%s0 + $0x18] sm:$0xff]
  %v114 = vld [vmem:[%s0 + $0x20] sm:$0xff]
  %v115 = vld [vmem:[%s0 + $0x28] sm:$0xff]
  %122 = vrot.lane.b32.xlu0 %v110, 125
  %v123 = vpop.permute.xlu0 %122
  %124 = vrot.lane.b32.xlu0 %v111, 125
  %v125 = vpop.permute.xlu0 %124
  %126 = vrot.lane.b32.xlu0 %v112, 125
  %v127 = vpop.permute.xlu0 %126
  %128 = vrot.lane.b32.xlu0 %v113, 125
  %v129 = vpop.permute.xlu0 %128
  %130 = vrot.lane.b32.xlu0 %v114, 125
  %v131 = vpop.permute.xlu0 %130
  %132 = vrot.lane.b32.xlu0 %v115, 125
  %v133 = vpop.permute.xlu0 %132
  %vm134 = vcmask 1022976
  %v135 = vsel %vm134, %v123, %v125
  %v136 = vsel %vm134, %v125, %v127
  %v137 = vsel %vm134, %v127, %v129
  %v138 = vsel %vm134, %v129, %v131
  %v139 = vsel %vm134, %v131, %v133
  %145 = vst [vmem:[#allocation2 + $0x78] sm:$0xff] %v135
  %146 = vst [vmem:[#allocation2 + $0x80] sm:$0xff] %v136
  %147 = vst [vmem:[#allocation2 + $0x88] sm:$0xff] %v137
  %148 = vst [vmem:[#allocation2 + $0x90] sm:$0xff] %v138
  %149 = vst [vmem:[#allocation2 + $0x98] sm:$0xff] %v139
  %v150 = vld [vmem:[%s0] sm:$0xff]
  %v151 = vld [vmem:[%s0 + $0x8] sm:$0xff]
  %v152 = vld [vmem:[%s0 + $0x10] sm:$0xff]
  %v153 = vld [vmem:[%s0 + $0x18] sm:$0xff]
  %v154 = vld [vmem:[%s0 + $0x20] sm:$0xff]
  %v155 = vld [vmem:[%s0 + $0x28] sm:$0xff]
  %162 = vrot.lane.b32.xlu0 %v150, 112
  %v163 = vpop.permute.xlu0 %162
  %164 = vrot.lane.b32.xlu0 %v151, 112
  %v165 = vpop.permute.xlu0 %164
  %166 = vrot.lane.b32.xlu0 %v152, 112
  %v167 = vpop.permute.xlu0 %166
  %168 = vrot.lane.b32.xlu0 %v153, 112
  %v169 = vpop.permute.xlu0 %168
  %170 = vrot.lane.b32.xlu0 %v154, 112
  %v171 = vpop.permute.xlu0 %170
  %172 = vrot.lane.b32.xlu0 %v155, 112
  %v173 = vpop.permute.xlu0 %172
  %vm174 = vcmask 916480
  %v175 = vsel %vm174, %v163, %v165
  %v176 = vsel %vm174, %v165, %v167
  %v177 = vsel %vm174, %v167, %v169
  %v178 = vsel %vm174, %v169, %v171
  %v179 = vsel %vm174, %v171, %v173
  %185 = vst [vmem:[#allocation2 + $0xa0] sm:$0xff] %v175
  %186 = vst [vmem:[#allocation2 + $0xa8] sm:$0xff] %v176
  %187 = vst [vmem:[#allocation2 + $0xb0] sm:$0xff] %v177
  %188 = vst [vmem:[#allocation2 + $0xb8] sm:$0xff] %v178
  %189 = vst [vmem:[#allocation2 + $0xc0] sm:$0xff] %v179
  %v190 = vld [vmem:[%s0] sm:$0xff]
  %v191 = vld [vmem:[%s0 + $0x8] sm:$0xff]
  %v192 = vld [vmem:[%s0 + $0x10] sm:$0xff]
  %v193 = vld [vmem:[%s0 + $0x18] sm:$0xff]
  %v194 = vld [vmem:[%s0 + $0x20] sm:$0xff]
  %v195 = vld [vmem:[%s0 + $0x28] sm:$0xff]
  %202 = vrot.lane.b32.xlu0 %v190, 111
  %v203 = vpop.permute.xlu0 %202
  %204 = vrot.lane.b32.xlu0 %v191, 111
  %v205 = vpop.permute.xlu0 %204
  %206 = vrot.lane.b32.xlu0 %v192, 111
  %v207 = vpop.permute.xlu0 %206
  %208 = vrot.lane.b32.xlu0 %v193, 111
  %v209 = vpop.permute.xlu0 %208
  %210 = vrot.lane.b32.xlu0 %v194, 111
  %v211 = vpop.permute.xlu0 %210
  %212 = vrot.lane.b32.xlu0 %v195, 111
  %v213 = vpop.permute.xlu0 %212
  %vm214 = vcmask 908288
  %v215 = vsel %vm214, %v203, %v205
  %v216 = vsel %vm214, %v205, %v207
  %v217 = vsel %vm214, %v207, %v209
  %v218 = vsel %vm214, %v209, %v211
  %v219 = vsel %vm214, %v211, %v213
  %225 = vst [vmem:[#allocation2 + $0xc8] sm:$0xff] %v215
  %226 = vst [vmem:[#allocation2 + $0xd0] sm:$0xff] %v216
  %227 = vst [vmem:[#allocation2 + $0xd8] sm:$0xff] %v217
  %228 = vst [vmem:[#allocation2 + $0xe0] sm:$0xff] %v218
  %229 = vst [vmem:[#allocation2 + $0xe8] sm:$0xff] %v219
  %v230 = vld [vmem:[%s0] sm:$0xff]
  %v231 = vld [vmem:[%s0 + $0x8] sm:$0xff]
  %v232 = vld [vmem:[%s0 + $0x10] sm:$0xff]
  %v233 = vld [vmem:[%s0 + $0x18] sm:$0xff]
  %v234 = vld [vmem:[%s0 + $0x20] sm:$0xff]
  %v235 = vld [vmem:[%s0 + $0x28] sm:$0xff]
  %242 = vrot.lane.b32.xlu0 %v230, 110
  %v243 = vpop.permute.xlu0 %242
  %244 = vrot.lane.b32.xlu0 %v231, 110
  %v245 = vpop.permute.xlu0 %244
  %246 = vrot.lane.b32.xlu0 %v232, 110
  %v247 = vpop.permute.xlu0 %246
  %248 = vrot.lane.b32.xlu0 %v233, 110
  %v249 = vpop.permute.xlu0 %248
  %250 = vrot.lane.b32.xlu0 %v234, 110
  %v251 = vpop.permute.xlu0 %250
  %252 = vrot.lane.b32.xlu0 %v235, 110
  %v253 = vpop.permute.xlu0 %252
  %vm254 = vcmask 900096
  %v255 = vsel %vm254, %v243, %v245
  %v256 = vsel %vm254, %v245, %v247
  %v257 = vsel %vm254, %v247, %v249
  %v258 = vsel %vm254, %v249, %v251
  %v259 = vsel %vm254, %v251, %v253
  %265 = vst [vmem:[#allocation2 + $0xf0] sm:$0xff] %v255
  %266 = vst [vmem:[#allocation2 + $0xf8] sm:$0xff] %v256
  %267 = vst [vmem:[#allocation2 + $0x100] sm:$0xff] %v257
  %268 = vst [vmem:[#allocation2 + $0x108] sm:$0xff] %v258
  %269 = vst [vmem:[#allocation2 + $0x110] sm:$0xff] %v259
  %v270 = vld [vmem:[%s0] sm:$0xff]
  %v271 = vld [vmem:[%s0 + $0x8] sm:$0xff]
  %v272 = vld [vmem:[%s0 + $0x10] sm:$0xff]
  %v273 = vld [vmem:[%s0 + $0x18] sm:$0xff]
  %v274 = vld [vmem:[%s0 + $0x20] sm:$0xff]
  %v275 = vld [vmem:[%s0 + $0x28] sm:$0xff]
  %282 = vrot.lane.b32.xlu0 %v270, 109
  %v283 = vpop.permute.xlu0 %282
  %284 = vrot.lane.b32.xlu0 %v271, 109
  %v285 = vpop.permute.xlu0 %284
  %286 = vrot.lane.b32.xlu0 %v272, 109
  %v287 = vpop.permute.xlu0 %286
  %288 = vrot.lane.b32.xlu0 %v273, 109
  %v289 = vpop.permute.xlu0 %288
  %290 = vrot.lane.b32.xlu0 %v274, 109
  %v291 = vpop.permute.xlu0 %290
  %292 = vrot.lane.b32.xlu0 %v275, 109
  %v293 = vpop.permute.xlu0 %292
  %vm294 = vcmask 891904
  %v295 = vsel %vm294, %v283, %v285
  %v296 = vsel %vm294, %v285, %v287
  %v297 = vsel %vm294, %v287, %v289
  %v298 = vsel %vm294, %v289, %v291
  %v299 = vsel %vm294, %v291, %v293
  %305 = vst [vmem:[#allocation2 + $0x118] sm:$0xff] %v295
  %306 = vst [vmem:[#allocation2 + $0x120] sm:$0xff] %v296
  %307 = vst [vmem:[#allocation2 + $0x128] sm:$0xff] %v297
  %308 = vst [vmem:[#allocation2 + $0x130] sm:$0xff] %v298
  %309 = vst [vmem:[#allocation2 + $0x138] sm:$0xff] %v299
  %v310 = vld [vmem:[%s0] sm:$0xff]
  %v311 = vld [vmem:[%s0 + $0x8] sm:$0xff]
  %v312 = vld [vmem:[%s0 + $0x10] sm:$0xff]
  %v313 = vld [vmem:[%s0 + $0x18] sm:$0xff]
  %v314 = vld [vmem:[%s0 + $0x20] sm:$0xff]
  %v315 = vld [vmem:[%s0 + $0x28] sm:$0xff]
  %322 = vrot.lane.b32.xlu0 %v310, 96
  %v323 = vpop.permute.xlu0 %322
  %324 = vrot.lane.b32.xlu0 %v311, 96
  %v325 = vpop.permute.xlu0 %324
  %326 = vrot.lane.b32.xlu0 %v312, 96
  %v327 = vpop.permute.xlu0 %326
  %328 = vrot.lane.b32.xlu0 %v313, 96
  %v329 = vpop.permute.xlu0 %328
  %330 = vrot.lane.b32.xlu0 %v314, 96
  %v331 = vpop.permute.xlu0 %330
  %332 = vrot.lane.b32.xlu0 %v315, 96
  %v333 = vpop.permute.xlu0 %332
  %vm334 = vcmask 785408
  %v335 = vsel %vm334, %v323, %v325
  %v336 = vsel %vm334, %v325, %v327
  %v337 = vsel %vm334, %v327, %v329
  %v338 = vsel %vm334, %v329, %v331
  %v339 = vsel %vm334, %v331, %v333
  %345 = vst [vmem:[#allocation2 + $0x140] sm:$0xff] %v335
  %346 = vst [vmem:[#allocation2 + $0x148] sm:$0xff] %v336
  %347 = vst [vmem:[#allocation2 + $0x150] sm:$0xff] %v337
  %348 = vst [vmem:[#allocation2 + $0x158] sm:$0xff] %v338
  %349 = vst [vmem:[#allocation2 + $0x160] sm:$0xff] %v339
  %v350 = vld [vmem:[%s0] sm:$0xff]
  %v351 = vld [vmem:[%s0 + $0x8] sm:$0xff]
  %v352 = vld [vmem:[%s0 + $0x10] sm:$0xff]
  %v353 = vld [vmem:[%s0 + $0x18] sm:$0xff]
  %v354 = vld [vmem:[%s0 + $0x20] sm:$0xff]
  %v355 = vld [vmem:[%s0 + $0x28] sm:$0xff]
  %362 = vrot.lane.b32.xlu0 %v350, 95
  %v363 = vpop.permute.xlu0 %362
  %364 = vrot.lane.b32.xlu0 %v351, 95
  %v365 = vpop.permute.xlu0 %364
  %366 = vrot.lane.b32.xlu0 %v352, 95
  %v367 = vpop.permute.xlu0 %366
  %368 = vrot.lane.b32.xlu0 %v353, 95
  %v369 = vpop.permute.xlu0 %368
  %370 = vrot.lane.b32.xlu0 %v354, 95
  %v371 = vpop.permute.xlu0 %370
  %372 = vrot.lane.b32.xlu0 %v355, 95
  %v373 = vpop.permute.xlu0 %372
  %vm374 = vcmask 777216
  %v375 = vsel %vm374, %v363, %v365
  %v376 = vsel %vm374, %v365, %v367
  %v377 = vsel %vm374, %v367, %v369
  %v378 = vsel %vm374, %v369, %v371
  %v379 = vsel %vm374, %v371, %v373
  %385 = vst [vmem:[#allocation2 + $0x168] sm:$0xff] %v375
  %386 = vst [vmem:[#allocation2 + $0x170] sm:$0xff] %v376
  %387 = vst [vmem:[#allocation2 + $0x178] sm:$0xff] %v377
  %388 = vst [vmem:[#allocation2 + $0x180] sm:$0xff] %v378
  %389 = vst [vmem:[#allocation2 + $0x188] sm:$0xff] %v379
  %v390 = vld [vmem:[%s0] sm:$0xff]
  %v391 = vld [vmem:[%s0 + $0x8] sm:$0xff]
  %v392 = vld [vmem:[%s0 + $0x10] sm:$0xff]
  %v393 = vld [vmem:[%s0 + $0x18] sm:$0xff]
  %v394 = vld [vmem:[%s0 + $0x20] sm:$0xff]
  %v395 = vld [vmem:[%s0 + $0x28] sm:$0xff]
  %402 = vrot.lane.b32.xlu0 %v390, 94
  %v403 = vpop.permute.xlu0 %402
  %404 = vrot.lane.b32.xlu0 %v391, 94
  %v405 = vpop.permute.xlu0 %404
  %406 = vrot.lane.b32.xlu0 %v392, 94
  %v407 = vpop.permute.xlu0 %406
  %408 = vrot.lane.b32.xlu0 %v393, 94
  %v409 = vpop.permute.xlu0 %408
  %410 = vrot.lane.b32.xlu0 %v394, 94
  %v411 = vpop.permute.xlu0 %410
  %412 = vrot.lane.b32.xlu0 %v395, 94
  %v413 = vpop.permute.xlu0 %412
  %vm414 = vcmask 769024
  %v415 = vsel %vm414, %v403, %v405
  %v416 = vsel %vm414, %v405, %v407
  %v417 = vsel %vm414, %v407, %v409
  %v418 = vsel %vm414, %v409, %v411
  %v419 = vsel %vm414, %v411, %v413
  %425 = vst [vmem:[#allocation2 + $0x190] sm:$0xff] %v415
  %426 = vst [vmem:[#allocation2 + $0x198] sm:$0xff] %v416
  %427 = vst [vmem:[#allocation2 + $0x1a0] sm:$0xff] %v417
  %428 = vst [vmem:[#allocation2 + $0x1a8] sm:$0xff] %v418
  %429 = vst [vmem:[#allocation2 + $0x1b0] sm:$0xff] %v419
  %v430 = vld [vmem:[%s0] sm:$0xff]
  %v431 = vld [vmem:[%s0 + $0x8] sm:$0xff]
  %v432 = vld [vmem:[%s0 + $0x10] sm:$0xff]
  %v433 = vld [vmem:[%s0 + $0x18] sm:$0xff]
  %v434 = vld [vmem:[%s0 + $0x20] sm:$0xff]
  %v435 = vld [vmem:[%s0 + $0x28] sm:$0xff]
  %442 = vrot.lane.b32.xlu0 %v430, 93
  %v443 = vpop.permute.xlu0 %442
  %444 = vrot.lane.b32.xlu0 %v431, 93
  %v445 = vpop.permute.xlu0 %444
  %446 = vrot.lane.b32.xlu0 %v432, 93
  %v447 = vpop.permute.xlu0 %446
  %448 = vrot.lane.b32.xlu0 %v433, 93
  %v449 = vpop.permute.xlu0 %448
  %450 = vrot.lane.b32.xlu0 %v434, 93
  %v451 = vpop.permute.xlu0 %450
  %452 = vrot.lane.b32.xlu0 %v435, 93
  %v453 = vpop.permute.xlu0 %452
  %vm454 = vcmask 760832
  %v455 = vsel %vm454, %v443, %v445
  %v456 = vsel %vm454, %v445, %v447
  %v457 = vsel %vm454, %v447, %v449
  %v458 = vsel %vm454, %v449, %v451
  %v459 = vsel %vm454, %v451, %v453
  %465 = vst [vmem:[#allocation2 + $0x1b8] sm:$0xff] %v455
  %466 = vst [vmem:[#allocation2 + $0x1c0] sm:$0xff] %v456
  %467 = vst [vmem:[#allocation2 + $0x1c8] sm:$0xff] %v457
  %468 = vst [vmem:[#allocation2 + $0x1d0] sm:$0xff] %v458
  %469 = vst [vmem:[#allocation2 + $0x1d8] sm:$0xff] %v459
  %v470 = vld [vmem:[%s0] sm:$0xff]
  %v471 = vld [vmem:[%s0 + $0x8] sm:$0xff]
  %v472 = vld [vmem:[%s0 + $0x10] sm:$0xff]
  %v473 = vld [vmem:[%s0 + $0x18] sm:$0xff]
  %v474 = vld [vmem:[%s0 + $0x20] sm:$0xff]
  %v475 = vld [vmem:[%s0 + $0x28] sm:$0xff]
  %482 = vrot.lane.b32.xlu0 %v470, 80
  %v483 = vpop.permute.xlu0 %482
  %484 = vrot.lane.b32.xlu0 %v471, 80
  %v485 = vpop.permute.xlu0 %484
  %486 = vrot.lane.b32.xlu0 %v472, 80
  %v487 = vpop.permute.xlu0 %486
  %488 = vrot.lane.b32.xlu0 %v473, 80
  %v489 = vpop.permute.xlu0 %488
  %490 = vrot.lane.b32.xlu0 %v474, 80
  %v491 = vpop.permute.xlu0 %490
  %492 = vrot.lane.b32.xlu0 %v475, 80
  %v493 = vpop.permute.xlu0 %492
  %vm494 = vcmask 654336
  %v495 = vsel %vm494, %v483, %v485
  %v496 = vsel %vm494, %v485, %v487
  %v497 = vsel %vm494, %v487, %v489
  %v498 = vsel %vm494, %v489, %v491
  %v499 = vsel %vm494, %v491, %v493
  %505 = vst [vmem:[#allocation2 + $0x1e0] sm:$0xff] %v495
  %506 = vst [vmem:[#allocation2 + $0x1e8] sm:$0xff] %v496
  %507 = vst [vmem:[#allocation2 + $0x1f0] sm:$0xff] %v497
  %508 = vst [vmem:[#allocation2 + $0x1f8] sm:$0xff] %v498
  %509 = vst [vmem:[#allocation2 + $0x200] sm:$0xff] %v499
  %v510 = vld [vmem:[%s0] sm:$0xff]
  %v511 = vld [vmem:[%s0 + $0x8] sm:$0xff]
  %v512 = vld [vmem:[%s0 + $0x10] sm:$0xff]
  %v513 = vld [vmem:[%s0 + $0x18] sm:$0xff]
  %v514 = vld [vmem:[%s0 + $0x20] sm:$0xff]
  %v515 = vld [vmem:[%s0 + $0x28] sm:$0xff]
  %522 = vrot.lane.b32.xlu0 %v510, 79
  %v523 = vpop.permute.xlu0 %522
  %524 = vrot.lane.b32.xlu0 %v511, 79
  %v525 = vpop.permute.xlu0 %524
  %526 = vrot.lane.b32.xlu0 %v512, 79
  %v527 = vpop.permute.xlu0 %526
  %528 = vrot.lane.b32.xlu0 %v513, 79
  %v529 = vpop.permute.xlu0 %528
  %530 = vrot.lane.b32.xlu0 %v514, 79
  %v531 = vpop.permute.xlu0 %530
  %532 = vrot.lane.b32.xlu0 %v515, 79
  %v533 = vpop.permute.xlu0 %532
  %vm534 = vcmask 646144
  %v535 = vsel %vm534, %v523, %v525
  %v536 = vsel %vm534, %v525, %v527
  %v537 = vsel %vm534, %v527, %v529
  %v538 = vsel %vm534, %v529, %v531
  %v539 = vsel %vm534, %v531, %v533
  %545 = vst [vmem:[#allocation2 + $0x208] sm:$0xff] %v535
  %546 = vst [vmem:[#allocation2 + $0x210] sm:$0xff] %v536
  %547 = vst [vmem:[#allocation2 + $0x218] sm:$0xff] %v537
  %548 = vst [vmem:[#allocation2 + $0x220] sm:$0xff] %v538
  %549 = vst [vmem:[#allocation2 + $0x228] sm:$0xff] %v539
  %v550 = vld [vmem:[%s0] sm:$0xff]
  %v551 = vld [vmem:[%s0 + $0x8] sm:$0xff]
  %v552 = vld [vmem:[%s0 + $0x10] sm:$0xff]
  %v553 = vld [vmem:[%s0 + $0x18] sm:$0xff]
  %v554 = vld [vmem:[%s0 + $0x20] sm:$0xff]
  %v555 = vld [vmem:[%s0 + $0x28] sm:$0xff]
  %562 = vrot.lane.b32.xlu0 %v550, 78
  %v563 = vpop.permute.xlu0 %562
  %564 = vrot.lane.b32.xlu0 %v551, 78
  %v565 = vpop.permute.xlu0 %564
  %566 = vrot.lane.b32.xlu0 %v552, 78
  %v567 = vpop.permute.xlu0 %566
  %568 = vrot.lane.b32.xlu0 %v553, 78
  %v569 = vpop.permute.xlu0 %568
  %570 = vrot.lane.b32.xlu0 %v554, 78
  %v571 = vpop.permute.xlu0 %570
  %572 = vrot.lane.b32.xlu0 %v555, 78
  %v573 = vpop.permute.xlu0 %572
  %vm574 = vcmask 637952
  %v575 = vsel %vm574, %v563, %v565
  %v576 = vsel %vm574, %v565, %v567
  %v577 = vsel %vm574, %v567, %v569
  %v578 = vsel %vm574, %v569, %v571
  %v579 = vsel %vm574, %v571, %v573
  %585 = vst [vmem:[#allocation2 + $0x230] sm:$0xff] %v575
  %586 = vst [vmem:[#allocation2 + $0x238] sm:$0xff] %v576
  %587 = vst [vmem:[#allocation2 + $0x240] sm:$0xff] %v577
  %588 = vst [vmem:[#allocation2 + $0x248] sm:$0xff] %v578
  %589 = vst [vmem:[#allocation2 + $0x250] sm:$0xff] %v579
  %v590 = vld [vmem:[%s0] sm:$0xff]
  %v591 = vld [vmem:[%s0 + $0x8] sm:$0xff]
  %v592 = vld [vmem:[%s0 + $0x10] sm:$0xff]
  %v593 = vld [vmem:[%s0 + $0x18] sm:$0xff]
  %v594 = vld [vmem:[%s0 + $0x20] sm:$0xff]
  %v595 = vld [vmem:[%s0 + $0x28] sm:$0xff]
  %602 = vrot.lane.b32.xlu0 %v590, 77
  %v603 = vpop.permute.xlu0 %602
  %604 = vrot.lane.b32.xlu0 %v591, 77
  %v605 = vpop.permute.xlu0 %604
  %606 = vrot.lane.b32.xlu0 %v592, 77
  %v607 = vpop.permute.xlu0 %606
  %608 = vrot.lane.b32.xlu0 %v593, 77
  %v609 = vpop.permute.xlu0 %608
  %610 = vrot.lane.b32.xlu0 %v594, 77
  %v611 = vpop.permute.xlu0 %610
  %612 = vrot.lane.b32.xlu0 %v595, 77
  %v613 = vpop.permute.xlu0 %612
  %vm614 = vcmask 629760
  %v615 = vsel %vm614, %v603, %v605
  %v616 = vsel %vm614, %v605, %v607
  %v617 = vsel %vm614, %v607, %v609
  %v618 = vsel %vm614, %v609, %v611
  %v619 = vsel %vm614, %v611, %v613
  %625 = vst [vmem:[#allocation2 + $0x258] sm:$0xff] %v615
  %626 = vst [vmem:[#allocation2 + $0x260] sm:$0xff] %v616
  %627 = vst [vmem:[#allocation2 + $0x268] sm:$0xff] %v617
  %628 = vst [vmem:[#allocation2 + $0x270] sm:$0xff] %v618
  %629 = vst [vmem:[#allocation2 + $0x278] sm:$0xff] %v619
  %v630 = vld [vmem:[%s1] sm:$0xff]
  %v631 = vld [vmem:[#allocation2] sm:$0xff]
  %v632 = vld [vmem:[#allocation2 + $0x8] sm:$0xff]
  %v633 = vld [vmem:[#allocation2 + $0x10] sm:$0xff]
  %v634 = vld [vmem:[#allocation2 + $0x18] sm:$0xff]
  %v635 = vld [vmem:[#allocation2 + $0x20] sm:$0xff]
  %v636 = vld [vmem:[#allocation2 + $0x28] sm:$0xff]
  %v637 = vld [vmem:[#allocation2 + $0x30] sm:$0xff]
  %v638 = vld [vmem:[#allocation2 + $0x38] sm:$0xff]
  %v639 = vld [vmem:[#allocation2 + $0x40] sm:$0xff]
  %v640 = vld [vmem:[#allocation2 + $0x48] sm:$0xff]
  %v641 = vld [vmem:[#allocation2 + $0x50] sm:$0xff]
  %v642 = vld [vmem:[#allocation2 + $0x58] sm:$0xff]
  %v643 = vld [vmem:[#allocation2 + $0x60] sm:$0xff]
  %v644 = vld [vmem:[#allocation2 + $0x68] sm:$0xff]
  %v645 = vld [vmem:[#allocation2 + $0x70] sm:$0xff]
  %v646 = vld [vmem:[#allocation2 + $0x78] sm:$0xff]
  %v647 = vld [vmem:[#allocation2 + $0x80] sm:$0xff]
  %v648 = vld [vmem:[#allocation2 + $0x88] sm:$0xff]
  %v649 = vld [vmem:[#allocation2 + $0x90] sm:$0xff]
  %v650 = vld [vmem:[#allocation2 + $0x98] sm:$0xff]
  %v651 = vld [vmem:[#allocation2 + $0xa0] sm:$0xff]
  %v652 = vld [vmem:[#allocation2 + $0xa8] sm:$0xff]
  %v653 = vld [vmem:[#allocation2 + $0xb0] sm:$0xff]
  %v654 = vld [vmem:[#allocation2 + $0xb8] sm:$0xff]
  %v655 = vld [vmem:[#allocation2 + $0xc0] sm:$0xff]
  %v656 = vld [vmem:[#allocation2 + $0xc8] sm:$0xff]
  %v657 = vld [vmem:[#allocation2 + $0xd0] sm:$0xff]
  %v658 = vld [vmem:[#allocation2 + $0xd8] sm:$0xff]
  %v659 = vld [vmem:[#allocation2 + $0xe0] sm:$0xff]
  %v660 = vld [vmem:[#allocation2 + $0xe8] sm:$0xff]
  %v661 = vld [vmem:[#allocation2 + $0xf0] sm:$0xff]
  %v662 = vld [vmem:[#allocation2 + $0xf8] sm:$0xff]
  %v663 = vld [vmem:[#allocation2 + $0x100] sm:$0xff]
  %v664 = vld [vmem:[#allocation2 + $0x108] sm:$0xff]
  %v665 = vld [vmem:[#allocation2 + $0x110] sm:$0xff]
  %v666 = vld [vmem:[#allocation2 + $0x118] sm:$0xff]
  %v667 = vld [vmem:[#allocation2 + $0x120] sm:$0xff]
  %v668 = vld [vmem:[#allocation2 + $0x128] sm:$0xff]
  %v669 = vld [vmem:[#allocation2 + $0x130] sm:$0xff]
  %v670 = vld [vmem:[#allocation2 + $0x138] sm:$0xff]
  %v671 = vld [vmem:[#allocation2 + $0x140] sm:$0xff]
  %v672 = vld [vmem:[#allocation2 + $0x148] sm:$0xff]
  %v673 = vld [vmem:[#allocation2 + $0x150] sm:$0xff]
  %v674 = vld [vmem:[#allocation2 + $0x158] sm:$0xff]
  %v675 = vld [vmem:[#allocation2 + $0x160] sm:$0xff]
  %v676 = vld [vmem:[#allocation2 + $0x168] sm:$0xff]
  %v677 = vld [vmem:[#allocation2 + $0x170] sm:$0xff]
  %v678 = vld [vmem:[#allocation2 + $0x178] sm:$0xff]
  %v679 = vld [vmem:[#allocation2 + $0x180] sm:$0xff]
  %v680 = vld [vmem:[#allocation2 + $0x188] sm:$0xff]
  %v681 = vld [vmem:[#allocation2 + $0x190] sm:$0xff]
  %v682 = vld [vmem:[#allocation2 + $0x198] sm:$0xff]
  %v683 = vld [vmem:[#allocation2 + $0x1a0] sm:$0xff]
  %v684 = vld [vmem:[#allocation2 + $0x1a8] sm:$0xff]
  %v685 = vld [vmem:[#allocation2 + $0x1b0] sm:$0xff]
  %v686 = vld [vmem:[#allocation2 + $0x1b8] sm:$0xff]
  %v687 = vld [vmem:[#allocation2 + $0x1c0] sm:$0xff]
  %v688 = vld [vmem:[#allocation2 + $0x1c8] sm:$0xff]
  %v689 = vld [vmem:[#allocation2 + $0x1d0] sm:$0xff]
  %v690 = vld [vmem:[#allocation2 + $0x1d8] sm:$0xff]
  %v691 = vld [vmem:[#allocation2 + $0x1e0] sm:$0xff]
  %v692 = vld [vmem:[#allocation2 + $0x1e8] sm:$0xff]
  %v693 = vld [vmem:[#allocation2 + $0x1f0] sm:$0xff]
  %v694 = vld [vmem:[#allocation2 + $0x1f8] sm:$0xff]
  %v695 = vld [vmem:[#allocation2 + $0x200] sm:$0xff]
  %v696 = vld [vmem:[#allocation2 + $0x208] sm:$0xff]
  %v697 = vld [vmem:[#allocation2 + $0x210] sm:$0xff]
  %v698 = vld [vmem:[#allocation2 + $0x218] sm:$0xff]
  %v699 = vld [vmem:[#allocation2 + $0x220] sm:$0xff]
  %v700 = vld [vmem:[#allocation2 + $0x228] sm:$0xff]
  %v701 = vld [vmem:[#allocation2 + $0x230] sm:$0xff]
  %v702 = vld [vmem:[#allocation2 + $0x238] sm:$0xff]
  %v703 = vld [vmem:[#allocation2 + $0x240] sm:$0xff]
  %v704 = vld [vmem:[#allocation2 + $0x248] sm:$0xff]
  %v705 = vld [vmem:[#allocation2 + $0x250] sm:$0xff]
  %v706 = vld [vmem:[#allocation2 + $0x258] sm:$0xff]
  %v707 = vld [vmem:[#allocation2 + $0x260] sm:$0xff]
  %v708 = vld [vmem:[#allocation2 + $0x268] sm:$0xff]
  %v709 = vld [vmem:[#allocation2 + $0x270] sm:$0xff]
  %v710 = vld [vmem:[#allocation2 + $0x278] sm:$0xff]
  %v711 = vld [vmem:[%s2] sm:$0xff]
  %713 = vset.pattern.permute.xlu0 0
  %714 = vperm.xlu0 %713, %v711
  %v715 = vpop.permute.xlu0 %714
  %717 = vmatpush.msra.mxu0 %v706
  %718 = vmatpush.msra.mxu0 %v701
  %719 = vmatpush.msra.mxu0 %v696
  %720 = vmatpush.msra.mxu0 %v691
  %721 = vmatpush.msra.mxu0 %v686
  %722 = vmatpush.msra.mxu0 %v681
  %723 = vmatpush.msra.mxu0 %v676
  %724 = vmatpush.msra.mxu0 %v671
  %725 = vmatpush.msra.mxu0 %v666
  %726 = vmatpush.msra.mxu0 %v661
  %727 = vmatpush.msra.mxu0 %v656
  %728 = vmatpush.msra.mxu0 %v651
  %729 = vmatpush.msra.mxu0 %v646
  %730 = vmatpush.msra.mxu0 %v641
  %731 = vmatpush.msra.mxu0 %v636
  %732 = vmatpush.msra.mxu0 %v631
  %733 = vmatmul.f32.gmra.mxu0 %v630
  %v734 = vpop.f32.mrf.mxu0
  %v735 = vadd.f32 %v715, %v734
  %736 = vdwg.mxu0
  %737 = vmatpush.msra.mxu0 %v707
  %738 = vmatpush.msra.mxu0 %v702
  %739 = vmatpush.msra.mxu0 %v697
  %740 = vmatpush.msra.mxu0 %v692
  %741 = vmatpush.msra.mxu0 %v687
  %742 = vmatpush.msra.mxu0 %v682
  %743 = vmatpush.msra.mxu0 %v677
  %744 = vmatpush.msra.mxu0 %v672
  %745 = vmatpush.msra.mxu0 %v667
  %746 = vmatpush.msra.mxu0 %v662
  %747 = vmatpush.msra.mxu0 %v657
  %748 = vmatpush.msra.mxu0 %v652
  %749 = vmatpush.msra.mxu0 %v647
  %750 = vmatpush.msra.mxu0 %v642
  %751 = vmatpush.msra.mxu0 %v637
  %752 = vmatpush.msra.mxu0 %v632
  %753 = vmatmul.f32.gmra.mxu0 %v630
  %v754 = vpop.f32.mrf.mxu0
  %v755 = vadd.f32 %v715, %v754
  %756 = vdwg.mxu0
  %757 = vmatpush.msra.mxu0 %v708
  %758 = vmatpush.msra.mxu0 %v703
  %759 = vmatpush.msra.mxu0 %v698
  %760 = vmatpush.msra.mxu0 %v693
  %761 = vmatpush.msra.mxu0 %v688
  %762 = vmatpush.msra.mxu0 %v683
  %763 = vmatpush.msra.mxu0 %v678
  %764 = vmatpush.msra.mxu0 %v673
  %765 = vmatpush.msra.mxu0 %v668
  %766 = vmatpush.msra.mxu0 %v663
  %767 = vmatpush.msra.mxu0 %v658
  %768 = vmatpush.msra.mxu0 %v653
  %769 = vmatpush.msra.mxu0 %v648
  %770 = vmatpush.msra.mxu0 %v643
  %771 = vmatpush.msra.mxu0 %v638
  %772 = vmatpush.msra.mxu0 %v633
  %773 = vmatmul.f32.gmra.mxu0 %v630
  %v774 = vpop.f32.mrf.mxu0
  %v775 = vadd.f32 %v715, %v774
  %776 = vdwg.mxu0
  %777 = vmatpush.msra.mxu0 %v709
  %778 = vmatpush.msra.mxu0 %v704
  %779 = vmatpush.msra.mxu0 %v699
  %780 = vmatpush.msra.mxu0 %v694
  %781 = vmatpush.msra.mxu0 %v689
  %782 = vmatpush.msra.mxu0 %v684
  %783 = vmatpush.msra.mxu0 %v679
  %784 = vmatpush.msra.mxu0 %v674
  %785 = vmatpush.msra.mxu0 %v669
  %786 = vmatpush.msra.mxu0 %v664
  %787 = vmatpush.msra.mxu0 %v659
  %788 = vmatpush.msra.mxu0 %v654
  %789 = vmatpush.msra.mxu0 %v649
  %790 = vmatpush.msra.mxu0 %v644
  %791 = vmatpush.msra.mxu0 %v639
  %792 = vmatpush.msra.mxu0 %v634
  %793 = vmatmul.f32.gmra.mxu0 %v630
  %v794 = vpop.f32.mrf.mxu0
  %v795 = vadd.f32 %v715, %v794
  %796 = vdwg.mxu0
  %797 = vmatpush.msra.mxu0 %v710
  %798 = vmatpush.msra.mxu0 %v705
  %799 = vmatpush.msra.mxu0 %v700
  %800 = vmatpush.msra.mxu0 %v695
  %801 = vmatpush.msra.mxu0 %v690
  %802 = vmatpush.msra.mxu0 %v685
  %803 = vmatpush.msra.mxu0 %v680
  %804 = vmatpush.msra.mxu0 %v675
  %805 = vmatpush.msra.mxu0 %v670
  %806 = vmatpush.msra.mxu0 %v665
  %807 = vmatpush.msra.mxu0 %v660
  %808 = vmatpush.msra.mxu0 %v655
  %809 = vmatpush.msra.mxu0 %v650
  %810 = vmatpush.msra.mxu0 %v645
  %811 = vmatpush.msra.mxu0 %v640
  %812 = vmatpush.msra.mxu0 %v635
  %813 = vmatmul.f32.gmra.mxu0 %v630
  %v814 = vpop.f32.mrf.mxu0
  %v815 = vadd.f32 %v715, %v814
  %816 = vdwg.mxu0
  %v817 = vmax.f32 %v735, 0.0
  %v818 = vmax.f32 %v755, 0.0
  %v819 = vmax.f32 %v775, 0.0
  %v820 = vmax.f32 %v795, 0.0
  %v821 = vmax.f32 %v815, 0.0
  %822 = vst [vmem:[#allocation3] sm:$0xff] %v817
  %823 = vst [vmem:[#allocation3 + $0x8] sm:$0xff] %v818
  %824 = vst [vmem:[#allocation3 + $0x10] sm:$0xff] %v819
  %825 = vst [vmem:[#allocation3 + $0x18] sm:$0xff] %v820
  %826 = vst [vmem:[#allocation3 + $0x20] sm:$0xff] %v821
  %v827 = vld [vmem:[#allocation3] sm:$0xff]
  %v828 = vld [vmem:[#allocation3 + $0x8] sm:$0xff]
  %v829 = vld [vmem:[#allocation3 + $0x10] sm:$0xff]
  %v830 = vld [vmem:[#allocation3 + $0x18] sm:$0xff]
  %831 = vst [vmem:[#allocation2] sm:$0xff] %v827
  %832 = vst [vmem:[#allocation2 + $0x8] sm:$0xff] %v828
  %833 = vst [vmem:[#allocation2 + $0x10] sm:$0xff] %v829
  %834 = vst [vmem:[#allocation2 + $0x18] sm:$0xff] %v830
  %v835 = vld [vmem:[#allocation3] sm:$0xff]
  %v836 = vld [vmem:[#allocation3 + $0x8] sm:$0xff]
  %v837 = vld [vmem:[#allocation3 + $0x10] sm:$0xff]
  %v838 = vld [vmem:[#allocation3 + $0x18] sm:$0xff]
  %v839 = vld [vmem:[#allocation3 + $0x20] sm:$0xff]
  %845 = vrot.lane.b32.xlu0 %v835, 127
  %v846 = vpop.permute.xlu0 %845
  %847 = vrot.lane.b32.xlu0 %v836, 127
  %v848 = vpop.permute.xlu0 %847
  %849 = vrot.lane.b32.xlu0 %v837, 127
  %v850 = vpop.permute.xlu0 %849
  %851 = vrot.lane.b32.xlu0 %v838, 127
  %v852 = vpop.permute.xlu0 %851
  %853 = vrot.lane.b32.xlu0 %v839, 127
  %v854 = vpop.permute.xlu0 %853
  %v855 = vsel %vm54, %v846, %v848
  %v856 = vsel %vm54, %v848, %v850
  %v857 = vsel %vm54, %v850, %v852
  %v858 = vsel %vm54, %v852, %v854
  %863 = vst [vmem:[#allocation2 + $0x28] sm:$0xff] %v855
  %864 = vst [vmem:[#allocation2 + $0x30] sm:$0xff] %v856
  %865 = vst [vmem:[#allocation2 + $0x38] sm:$0xff] %v857
  %866 = vst [vmem:[#allocation2 + $0x40] sm:$0xff] %v858
  %v867 = vld [vmem:[#allocation3] sm:$0xff]
  %v868 = vld [vmem:[#allocation3 + $0x8] sm:$0xff]
  %v869 = vld [vmem:[#allocation3 + $0x10] sm:$0xff]
  %v870 = vld [vmem:[#allocation3 + $0x18] sm:$0xff]
  %v871 = vld [vmem:[#allocation3 + $0x20] sm:$0xff]
  %877 = vrot.lane.b32.xlu0 %v867, 126
  %v878 = vpop.permute.xlu0 %877
  %879 = vrot.lane.b32.xlu0 %v868, 126
  %v880 = vpop.permute.xlu0 %879
  %881 = vrot.lane.b32.xlu0 %v869, 126
  %v882 = vpop.permute.xlu0 %881
  %883 = vrot.lane.b32.xlu0 %v870, 126
  %v884 = vpop.permute.xlu0 %883
  %885 = vrot.lane.b32.xlu0 %v871, 126
  %v886 = vpop.permute.xlu0 %885
  %v887 = vsel %vm94, %v878, %v880
  %v888 = vsel %vm94, %v880, %v882
  %v889 = vsel %vm94, %v882, %v884
  %v890 = vsel %vm94, %v884, %v886
  %895 = vst [vmem:[#allocation2 + $0x50] sm:$0xff] %v887
  %896 = vst [vmem:[#allocation2 + $0x58] sm:$0xff] %v888
  %897 = vst [vmem:[#allocation2 + $0x60] sm:$0xff] %v889
  %898 = vst [vmem:[#allocation2 + $0x68] sm:$0xff] %v890
  %v899 = vld [vmem:[#allocation3] sm:$0xff]
  %v900 = vld [vmem:[#allocation3 + $0x8] sm:$0xff]
  %v901 = vld [vmem:[#allocation3 + $0x10] sm:$0xff]
  %v902 = vld [vmem:[#allocation3 + $0x18] sm:$0xff]
  %v903 = vld [vmem:[#allocation3 + $0x20] sm:$0xff]
  %909 = vrot.lane.b32.xlu0 %v899, 125
  %v910 = vpop.permute.xlu0 %909
  %911 = vrot.lane.b32.xlu0 %v900, 125
  %v912 = vpop.permute.xlu0 %911
  %913 = vrot.lane.b32.xlu0 %v901, 125
  %v914 = vpop.permute.xlu0 %913
  %915 = vrot.lane.b32.xlu0 %v902, 125
  %v916 = vpop.permute.xlu0 %915
  %917 = vrot.lane.b32.xlu0 %v903, 125
  %v918 = vpop.permute.xlu0 %917
  %v919 = vsel %vm134, %v910, %v912
  %v920 = vsel %vm134, %v912, %v914
  %v921 = vsel %vm134, %v914, %v916
  %v922 = vsel %vm134, %v916, %v918
  %927 = vst [vmem:[#allocation2 + $0x78] sm:$0xff] %v919
  %928 = vst [vmem:[#allocation2 + $0x80] sm:$0xff] %v920
  %929 = vst [vmem:[#allocation2 + $0x88] sm:$0xff] %v921
  %930 = vst [vmem:[#allocation2 + $0x90] sm:$0xff] %v922
  %v931 = vld [vmem:[#allocation3] sm:$0xff]
  %v932 = vld [vmem:[#allocation3 + $0x8] sm:$0xff]
  %v933 = vld [vmem:[#allocation3 + $0x10] sm:$0xff]
  %v934 = vld [vmem:[#allocation3 + $0x18] sm:$0xff]
  %v935 = vld [vmem:[#allocation3 + $0x20] sm:$0xff]
  %941 = vrot.lane.b32.xlu0 %v931, 112
  %v942 = vpop.permute.xlu0 %941
  %943 = vrot.lane.b32.xlu0 %v932, 112
  %v944 = vpop.permute.xlu0 %943
  %945 = vrot.lane.b32.xlu0 %v933, 112
  %v946 = vpop.permute.xlu0 %945
  %947 = vrot.lane.b32.xlu0 %v934, 112
  %v948 = vpop.permute.xlu0 %947
  %949 = vrot.lane.b32.xlu0 %v935, 112
  %v950 = vpop.permute.xlu0 %949
  %v951 = vsel %vm174, %v942, %v944
  %v952 = vsel %vm174, %v944, %v946
  %v953 = vsel %vm174, %v946, %v948
  %v954 = vsel %vm174, %v948, %v950
  %959 = vst [vmem:[#allocation2 + $0xa0] sm:$0xff] %v951
  %960 = vst [vmem:[#allocation2 + $0xa8] sm:$0xff] %v952
  %961 = vst [vmem:[#allocation2 + $0xb0] sm:$0xff] %v953
  %962 = vst [vmem:[#allocation2 + $0xb8] sm:$0xff] %v954
  %v963 = vld [vmem:[#allocation3] sm:$0xff]
  %v964 = vld [vmem:[#allocation3 + $0x8] sm:$0xff]
  %v965 = vld [vmem:[#allocation3 + $0x10] sm:$0xff]
  %v966 = vld [vmem:[#allocation3 + $0x18] sm:$0xff]
  %v967 = vld [vmem:[#allocation3 + $0x20] sm:$0xff]
  %973 = vrot.lane.b32.xlu0 %v963, 111
  %v974 = vpop.permute.xlu0 %973
  %975 = vrot.lane.b32.xlu0 %v964, 111
  %v976 = vpop.permute.xlu0 %975
  %977 = vrot.lane.b32.xlu0 %v965, 111
  %v978 = vpop.permute.xlu0 %977
  %979 = vrot.lane.b32.xlu0 %v966, 111
  %v980 = vpop.permute.xlu0 %979
  %981 = vrot.lane.b32.xlu0 %v967, 111
  %v982 = vpop.permute.xlu0 %981
  %v983 = vsel %vm214, %v974, %v976
  %v984 = vsel %vm214, %v976, %v978
  %v985 = vsel %vm214, %v978, %v980
  %v986 = vsel %vm214, %v980, %v982
  %991 = vst [vmem:[#allocation2 + $0xc8] sm:$0xff] %v983
  %992 = vst [vmem:[#allocation2 + $0xd0] sm:$0xff] %v984
  %993 = vst [vmem:[#allocation2 + $0xd8] sm:$0xff] %v985
  %994 = vst [vmem:[#allocation2 + $0xe0] sm:$0xff] %v986
  %v995 = vld [vmem:[#allocation3] sm:$0xff]
  %v996 = vld [vmem:[#allocation3 + $0x8] sm:$0xff]
  %v997 = vld [vmem:[#allocation3 + $0x10] sm:$0xff]
  %v998 = vld [vmem:[#allocation3 + $0x18] sm:$0xff]
  %v999 = vld [vmem:[#allocation3 + $0x20] sm:$0xff]
  %1005 = vrot.lane.b32.xlu0 %v995, 110
  %v1006 = vpop.permute.xlu0 %1005
  %1007 = vrot.lane.b32.xlu0 %v996, 110
  %v1008 = vpop.permute.xlu0 %1007
  %1009 = vrot.lane.b32.xlu0 %v997, 110
  %v1010 = vpop.permute.xlu0 %1009
  %1011 = vrot.lane.b32.xlu0 %v998, 110
  %v1012 = vpop.permute.xlu0 %1011
  %1013 = vrot.lane.b32.xlu0 %v999, 110
  %v1014 = vpop.permute.xlu0 %1013
  %v1015 = vsel %vm254, %v1006, %v1008
  %v1016 = vsel %vm254, %v1008, %v1010
  %v1017 = vsel %vm254, %v1010, %v1012
  %v1018 = vsel %vm254, %v1012, %v1014
  %1023 = vst [vmem:[#allocation2 + $0xf0] sm:$0xff] %v1015
  %1024 = vst [vmem:[#allocation2 + $0xf8] sm:$0xff] %v1016
  %1025 = vst [vmem:[#allocation2 + $0x100] sm:$0xff] %v1017
  %1026 = vst [vmem:[#allocation2 + $0x108] sm:$0xff] %v1018
  %v1027 = vld [vmem:[#allocation3] sm:$0xff]
  %v1028 = vld [vmem:[#allocation3 + $0x8] sm:$0xff]
  %v1029 = vld [vmem:[#allocation3 + $0x10] sm:$0xff]
  %v1030 = vld [vmem:[#allocation3 + $0x18] sm:$0xff]
  %v1031 = vld [vmem:[#allocation3 + $0x20] sm:$0xff]
  %1037 = vrot.lane.b32.xlu0 %v1027, 109
  %v1038 = vpop.permute.xlu0 %1037
  %1039 = vrot.lane.b32.xlu0 %v1028, 109
  %v1040 = vpop.permute.xlu0 %1039
  %1041 = vrot.lane.b32.xlu0 %v1029, 109
  %v1042 = vpop.permute.xlu0 %1041
  %1043 = vrot.lane.b32.xlu0 %v1030, 109
  %v1044 = vpop.permute.xlu0 %1043
  %1045 = vrot.lane.b32.xlu0 %v1031, 109
  %v1046 = vpop.permute.xlu0 %1045
  %v1047 = vsel %vm294, %v1038, %v1040
  %v1048 = vsel %vm294, %v1040, %v1042
  %v1049 = vsel %vm294, %v1042, %v1044
  %v1050 = vsel %vm294, %v1044, %v1046
  %1055 = vst [vmem:[#allocation2 + $0x118] sm:$0xff] %v1047
  %1056 = vst [vmem:[#allocation2 + $0x120] sm:$0xff] %v1048
  %1057 = vst [vmem:[#allocation2 + $0x128] sm:$0xff] %v1049
  %1058 = vst [vmem:[#allocation2 + $0x130] sm:$0xff] %v1050
  %v1059 = vld [vmem:[#allocation3] sm:$0xff]
  %v1060 = vld [vmem:[#allocation3 + $0x8] sm:$0xff]
  %v1061 = vld [vmem:[#allocation3 + $0x10] sm:$0xff]
  %v1062 = vld [vmem:[#allocation3 + $0x18] sm:$0xff]
  %v1063 = vld [vmem:[#allocation3 + $0x20] sm:$0xff]
  %1069 = vrot.lane.b32.xlu0 %v1059, 96
  %v1070 = vpop.permute.xlu0 %1069
  %1071 = vrot.lane.b32.xlu0 %v1060, 96
  %v1072 = vpop.permute.xlu0 %1071
  %1073 = vrot.lane.b32.xlu0 %v1061, 96
  %v1074 = vpop.permute.xlu0 %1073
  %1075 = vrot.lane.b32.xlu0 %v1062, 96
  %v1076 = vpop.permute.xlu0 %1075
  %1077 = vrot.lane.b32.xlu0 %v1063, 96
  %v1078 = vpop.permute.xlu0 %1077
  %v1079 = vsel %vm334, %v1070, %v1072
  %v1080 = vsel %vm334, %v1072, %v1074
  %v1081 = vsel %vm334, %v1074, %v1076
  %v1082 = vsel %vm334, %v1076, %v1078
  %1087 = vst [vmem:[#allocation2 + $0x140] sm:$0xff] %v1079
  %1088 = vst [vmem:[#allocation2 + $0x148] sm:$0xff] %v1080
  %1089 = vst [vmem:[#allocation2 + $0x150] sm:$0xff] %v1081
  %1090 = vst [vmem:[#allocation2 + $0x158] sm:$0xff] %v1082
  %v1091 = vld [vmem:[#allocation3] sm:$0xff]
  %v1092 = vld [vmem:[#allocation3 + $0x8] sm:$0xff]
  %v1093 = vld [vmem:[#allocation3 + $0x10] sm:$0xff]
  %v1094 = vld [vmem:[#allocation3 + $0x18] sm:$0xff]
  %v1095 = vld [vmem:[#allocation3 + $0x20] sm:$0xff]
  %1101 = vrot.lane.b32.xlu0 %v1091, 95
  %v1102 = vpop.permute.xlu0 %1101
  %1103 = vrot.lane.b32.xlu0 %v1092, 95
  %v1104 = vpop.permute.xlu0 %1103
  %1105 = vrot.lane.b32.xlu0 %v1093, 95
  %v1106 = vpop.permute.xlu0 %1105
  %1107 = vrot.lane.b32.xlu0 %v1094, 95
  %v1108 = vpop.permute.xlu0 %1107
  %1109 = vrot.lane.b32.xlu0 %v1095, 95
  %v1110 = vpop.permute.xlu0 %1109
  %v1111 = vsel %vm374, %v1102, %v1104
  %v1112 = vsel %vm374, %v1104, %v1106
  %v1113 = vsel %vm374, %v1106, %v1108
  %v1114 = vsel %vm374, %v1108, %v1110
  %1119 = vst [vmem:[#allocation2 + $0x168] sm:$0xff] %v1111
  %1120 = vst [vmem:[#allocation2 + $0x170] sm:$0xff] %v1112
  %1121 = vst [vmem:[#allocation2 + $0x178] sm:$0xff] %v1113
  %1122 = vst [vmem:[#allocation2 + $0x180] sm:$0xff] %v1114
  %v1123 = vld [vmem:[#allocation3] sm:$0xff]
  %v1124 = vld [vmem:[#allocation3 + $0x8] sm:$0xff]
  %v1125 = vld [vmem:[#allocation3 + $0x10] sm:$0xff]
  %v1126 = vld [vmem:[#allocation3 + $0x18] sm:$0xff]
  %v1127 = vld [vmem:[#allocation3 + $0x20] sm:$0xff]
  %1133 = vrot.lane.b32.xlu0 %v1123, 94
  %v1134 = vpop.permute.xlu0 %1133
  %1135 = vrot.lane.b32.xlu0 %v1124, 94
  %v1136 = vpop.permute.xlu0 %1135
  %1137 = vrot.lane.b32.xlu0 %v1125, 94
  %v1138 = vpop.permute.xlu0 %1137
  %1139 = vrot.lane.b32.xlu0 %v1126, 94
  %v1140 = vpop.permute.xlu0 %1139
  %1141 = vrot.lane.b32.xlu0 %v1127, 94
  %v1142 = vpop.permute.xlu0 %1141
  %v1143 = vsel %vm414, %v1134, %v1136
  %v1144 = vsel %vm414, %v1136, %v1138
  %v1145 = vsel %vm414, %v1138, %v1140
  %v1146 = vsel %vm414, %v1140, %v1142
  %1151 = vst [vmem:[#allocation2 + $0x190] sm:$0xff] %v1143
  %1152 = vst [vmem:[#allocation2 + $0x198] sm:$0xff] %v1144
  %1153 = vst [vmem:[#allocation2 + $0x1a0] sm:$0xff] %v1145
  %1154 = vst [vmem:[#allocation2 + $0x1a8] sm:$0xff] %v1146
  %v1155 = vld [vmem:[#allocation3] sm:$0xff]
  %v1156 = vld [vmem:[#allocation3 + $0x8] sm:$0xff]
  %v1157 = vld [vmem:[#allocation3 + $0x10] sm:$0xff]
  %v1158 = vld [vmem:[#allocation3 + $0x18] sm:$0xff]
  %v1159 = vld [vmem:[#allocation3 + $0x20] sm:$0xff]
  %1165 = vrot.lane.b32.xlu0 %v1155, 93
  %v1166 = vpop.permute.xlu0 %1165
  %1167 = vrot.lane.b32.xlu0 %v1156, 93
  %v1168 = vpop.permute.xlu0 %1167
  %1169 = vrot.lane.b32.xlu0 %v1157, 93
  %v1170 = vpop.permute.xlu0 %1169
  %1171 = vrot.lane.b32.xlu0 %v1158, 93
  %v1172 = vpop.permute.xlu0 %1171
  %1173 = vrot.lane.b32.xlu0 %v1159, 93
  %v1174 = vpop.permute.xlu0 %1173
  %v1175 = vsel %vm454, %v1166, %v1168
  %v1176 = vsel %vm454, %v1168, %v1170
  %v1177 = vsel %vm454, %v1170, %v1172
  %v1178 = vsel %vm454, %v1172, %v1174
  %1183 = vst [vmem:[#allocation2 + $0x1b8] sm:$0xff] %v1175
  %1184 = vst [vmem:[#allocation2 + $0x1c0] sm:$0xff] %v1176
  %1185 = vst [vmem:[#allocation2 + $0x1c8] sm:$0xff] %v1177
  %1186 = vst [vmem:[#allocation2 + $0x1d0] sm:$0xff] %v1178
  %v1187 = vld [vmem:[#allocation3] sm:$0xff]
  %v1188 = vld [vmem:[#allocation3 + $0x8] sm:$0xff]
  %v1189 = vld [vmem:[#allocation3 + $0x10] sm:$0xff]
  %v1190 = vld [vmem:[#allocation3 + $0x18] sm:$0xff]
  %v1191 = vld [vmem:[#allocation3 + $0x20] sm:$0xff]
  %1197 = vrot.lane.b32.xlu0 %v1187, 80
  %v1198 = vpop.permute.xlu0 %1197
  %1199 = vrot.lane.b32.xlu0 %v1188, 80
  %v1200 = vpop.permute.xlu0 %1199
  %1201 = vrot.lane.b32.xlu0 %v1189, 80
  %v1202 = vpop.permute.xlu0 %1201
  %1203 = vrot.lane.b32.xlu0 %v1190, 80
  %v1204 = vpop.permute.xlu0 %1203
  %1205 = vrot.lane.b32.xlu0 %v1191, 80
  %v1206 = vpop.permute.xlu0 %1205
  %v1207 = vsel %vm494, %v1198, %v1200
  %v1208 = vsel %vm494, %v1200, %v1202
  %v1209 = vsel %vm494, %v1202, %v1204
  %v1210 = vsel %vm494, %v1204, %v1206
  %1215 = vst [vmem:[#allocation2 + $0x1e0] sm:$0xff] %v1207
  %1216 = vst [vmem:[#allocation2 + $0x1e8] sm:$0xff] %v1208
  %1217 = vst [vmem:[#allocation2 + $0x1f0] sm:$0xff] %v1209
  %1218 = vst [vmem:[#allocation2 + $0x1f8] sm:$0xff] %v1210
  %v1219 = vld [vmem:[#allocation3] sm:$0xff]
  %v1220 = vld [vmem:[#allocation3 + $0x8] sm:$0xff]
  %v1221 = vld [vmem:[#allocation3 + $0x10] sm:$0xff]
  %v1222 = vld [vmem:[#allocation3 + $0x18] sm:$0xff]
  %v1223 = vld [vmem:[#allocation3 + $0x20] sm:$0xff]
  %1229 = vrot.lane.b32.xlu0 %v1219, 79
  %v1230 = vpop.permute.xlu0 %1229
  %1231 = vrot.lane.b32.xlu0 %v1220, 79
  %v1232 = vpop.permute.xlu0 %1231
  %1233 = vrot.lane.b32.xlu0 %v1221, 79
  %v1234 = vpop.permute.xlu0 %1233
  %1235 = vrot.lane.b32.xlu0 %v1222, 79
  %v1236 = vpop.permute.xlu0 %1235
  %1237 = vrot.lane.b32.xlu0 %v1223, 79
  %v1238 = vpop.permute.xlu0 %1237
  %v1239 = vsel %vm534, %v1230, %v1232
  %v1240 = vsel %vm534, %v1232, %v1234
  %v1241 = vsel %vm534, %v1234, %v1236
  %v1242 = vsel %vm534, %v1236, %v1238
  %1247 = vst [vmem:[#allocation2 + $0x208] sm:$0xff] %v1239
  %1248 = vst [vmem:[#allocation2 + $0x210] sm:$0xff] %v1240
  %1249 = vst [vmem:[#allocation2 + $0x218] sm:$0xff] %v1241
  %1250 = vst [vmem:[#allocation2 + $0x220] sm:$0xff] %v1242
  %v1251 = vld [vmem:[#allocation3] sm:$0xff]
  %v1252 = vld [vmem:[#allocation3 + $0x8] sm:$0xff]
  %v1253 = vld [vmem:[#allocation3 + $0x10] sm:$0xff]
  %v1254 = vld [vmem:[#allocation3 + $0x18] sm:$0xff]
  %v1255 = vld [vmem:[#allocation3 + $0x20] sm:$0xff]
  %1261 = vrot.lane.b32.xlu0 %v1251, 78
  %v1262 = vpop.permute.xlu0 %1261
  %1263 = vrot.lane.b32.xlu0 %v1252, 78
  %v1264 = vpop.permute.xlu0 %1263
  %1265 = vrot.lane.b32.xlu0 %v1253, 78
  %v1266 = vpop.permute.xlu0 %1265
  %1267 = vrot.lane.b32.xlu0 %v1254, 78
  %v1268 = vpop.permute.xlu0 %1267
  %1269 = vrot.lane.b32.xlu0 %v1255, 78
  %v1270 = vpop.permute.xlu0 %1269
  %v1271 = vsel %vm574, %v1262, %v1264
  %v1272 = vsel %vm574, %v1264, %v1266
  %v1273 = vsel %vm574, %v1266, %v1268
  %v1274 = vsel %vm574, %v1268, %v1270
  %1279 = vst [vmem:[#allocation2 + $0x230] sm:$0xff] %v1271
  %1280 = vst [vmem:[#allocation2 + $0x238] sm:$0xff] %v1272
  %1281 = vst [vmem:[#allocation2 + $0x240] sm:$0xff] %v1273
  %1282 = vst [vmem:[#allocation2 + $0x248] sm:$0xff] %v1274
  %v1283 = vld [vmem:[#allocation3] sm:$0xff]
  %v1284 = vld [vmem:[#allocation3 + $0x8] sm:$0xff]
  %v1285 = vld [vmem:[#allocation3 + $0x10] sm:$0xff]
  %v1286 = vld [vmem:[#allocation3 + $0x18] sm:$0xff]
  %v1287 = vld [vmem:[#allocation3 + $0x20] sm:$0xff]
  %1293 = vrot.lane.b32.xlu0 %v1283, 77
  %v1294 = vpop.permute.xlu0 %1293
  %1295 = vrot.lane.b32.xlu0 %v1284, 77
  %v1296 = vpop.permute.xlu0 %1295
  %1297 = vrot.lane.b32.xlu0 %v1285, 77
  %v1298 = vpop.permute.xlu0 %1297
  %1299 = vrot.lane.b32.xlu0 %v1286, 77
  %v1300 = vpop.permute.xlu0 %1299
  %1301 = vrot.lane.b32.xlu0 %v1287, 77
  %v1302 = vpop.permute.xlu0 %1301
  %v1303 = vsel %vm614, %v1294, %v1296
  %v1304 = vsel %vm614, %v1296, %v1298
  %v1305 = vsel %vm614, %v1298, %v1300
  %v1306 = vsel %vm614, %v1300, %v1302
  %1311 = vst [vmem:[#allocation2 + $0x258] sm:$0xff] %v1303
  %1312 = vst [vmem:[#allocation2 + $0x260] sm:$0xff] %v1304
  %1313 = vst [vmem:[#allocation2 + $0x268] sm:$0xff] %v1305
  %1314 = vst [vmem:[#allocation2 + $0x270] sm:$0xff] %v1306
  %v1315 = vld [vmem:[%s3] sm:$0xff]
  %v1316 = vld [vmem:[#allocation2] sm:$0xff]
  %v1317 = vld [vmem:[#allocation2 + $0x8] sm:$0xff]
  %v1318 = vld [vmem:[#allocation2 + $0x10] sm:$0xff]
  %v1319 = vld [vmem:[#allocation2 + $0x18] sm:$0xff]
  %v1320 = vld [vmem:[#allocation2 + $0x28] sm:$0xff]
  %v1321 = vld [vmem:[#allocation2 + $0x30] sm:$0xff]
  %v1322 = vld [vmem:[#allocation2 + $0x38] sm:$0xff]
  %v1323 = vld [vmem:[#allocation2 + $0x40] sm:$0xff]
  %v1324 = vld [vmem:[#allocation2 + $0x50] sm:$0xff]
  %v1325 = vld [vmem:[#allocation2 + $0x58] sm:$0xff]
  %v1326 = vld [vmem:[#allocation2 + $0x60] sm:$0xff]
  %v1327 = vld [vmem:[#allocation2 + $0x68] sm:$0xff]
  %v1328 = vld [vmem:[#allocation2 + $0x78] sm:$0xff]
  %v1329 = vld [vmem:[#allocation2 + $0x80] sm:$0xff]
  %v1330 = vld [vmem:[#allocation2 + $0x88] sm:$0xff]
  %v1331 = vld [vmem:[#allocation2 + $0x90] sm:$0xff]
  %v1332 = vld [vmem:[#allocation2 + $0xa0] sm:$0xff]
  %v1333 = vld [vmem:[#allocation2 + $0xa8] sm:$0xff]
  %v1334 = vld [vmem:[#allocation2 + $0xb0] sm:$0xff]
  %v1335 = vld [vmem:[#allocation2 + $0xb8] sm:$0xff]
  %v1336 = vld [vmem:[#allocation2 + $0xc8] sm:$0xff]
  %v1337 = vld [vmem:[#allocation2 + $0xd0] sm:$0xff]
  %v1338 = vld [vmem:[#allocation2 + $0xd8] sm:$0xff]
  %v1339 = vld [vmem:[#allocation2 + $0xe0] sm:$0xff]
  %v1340 = vld [vmem:[#allocation2 + $0xf0] sm:$0xff]
  %v1341 = vld [vmem:[#allocation2 + $0xf8] sm:$0xff]
  %v1342 = vld [vmem:[#allocation2 + $0x100] sm:$0xff]
  %v1343 = vld [vmem:[#allocation2 + $0x108] sm:$0xff]
  %v1344 = vld [vmem:[#allocation2 + $0x118] sm:$0xff]
  %v1345 = vld [vmem:[#allocation2 + $0x120] sm:$0xff]
  %v1346 = vld [vmem:[#allocation2 + $0x128] sm:$0xff]
  %v1347 = vld [vmem:[#allocation2 + $0x130] sm:$0xff]
  %v1348 = vld [vmem:[#allocation2 + $0x140] sm:$0xff]
  %v1349 = vld [vmem:[#allocation2 + $0x148] sm:$0xff]
  %v1350 = vld [vmem:[#allocation2 + $0x150] sm:$0xff]
  %v1351 = vld [vmem:[#allocation2 + $0x158] sm:$0xff]
  %v1352 = vld [vmem:[#allocation2 + $0x168] sm:$0xff]
  %v1353 = vld [vmem:[#allocation2 + $0x170] sm:$0xff]
  %v1354 = vld [vmem:[#allocation2 + $0x178] sm:$0xff]
  %v1355 = vld [vmem:[#allocation2 + $0x180] sm:$0xff]
  %v1356 = vld [vmem:[#allocation2 + $0x190] sm:$0xff]
  %v1357 = vld [vmem:[#allocation2 + $0x198] sm:$0xff]
  %v1358 = vld [vmem:[#allocation2 + $0x1a0] sm:$0xff]
  %v1359 = vld [vmem:[#allocation2 + $0x1a8] sm:$0xff]
  %v1360 = vld [vmem:[#allocation2 + $0x1b8] sm:$0xff]
  %v1361 = vld [vmem:[#allocation2 + $0x1c0] sm:$0xff]
  %v1362 = vld [vmem:[#allocation2 + $0x1c8] sm:$0xff]
  %v1363 = vld [vmem:[#allocation2 + $0x1d0] sm:$0xff]
  %v1364 = vld [vmem:[#allocation2 + $0x1e0] sm:$0xff]
  %v1365 = vld [vmem:[#allocation2 + $0x1e8] sm:$0xff]
  %v1366 = vld [vmem:[#allocation2 + $0x1f0] sm:$0xff]
  %v1367 = vld [vmem:[#allocation2 + $0x1f8] sm:$0xff]
  %v1368 = vld [vmem:[#allocation2 + $0x208] sm:$0xff]
  %v1369 = vld [vmem:[#allocation2 + $0x210] sm:$0xff]
  %v1370 = vld [vmem:[#allocation2 + $0x218] sm:$0xff]
  %v1371 = vld [vmem:[#allocation2 + $0x220] sm:$0xff]
  %v1372 = vld [vmem:[#allocation2 + $0x230] sm:$0xff]
  %v1373 = vld [vmem:[#allocation2 + $0x238] sm:$0xff]
  %v1374 = vld [vmem:[#allocation2 + $0x240] sm:$0xff]
  %v1375 = vld [vmem:[#allocation2 + $0x248] sm:$0xff]
  %v1376 = vld [vmem:[#allocation2 + $0x258] sm:$0xff]
  %v1377 = vld [vmem:[#allocation2 + $0x260] sm:$0xff]
  %v1378 = vld [vmem:[#allocation2 + $0x268] sm:$0xff]
  %v1379 = vld [vmem:[#allocation2 + $0x270] sm:$0xff]
  %v1380 = vld [vmem:[%s4] sm:$0xff]
  %1382 = vset.pattern.permute.xlu0 0
  %1383 = vperm.xlu0 %1382, %v1380
  %v1384 = vpop.permute.xlu0 %1383
  %1386 = vmatpush.msra.mxu0 %v1376
  %1387 = vmatpush.msra.mxu0 %v1372
  %1388 = vmatpush.msra.mxu0 %v1368
  %1389 = vmatpush.msra.mxu0 %v1364
  %1390 = vmatpush.msra.mxu0 %v1360
  %1391 = vmatpush.msra.mxu0 %v1356
  %1392 = vmatpush.msra.mxu0 %v1352
  %1393 = vmatpush.msra.mxu0 %v1348
  %1394 = vmatpush.msra.mxu0 %v1344
  %1395 = vmatpush.msra.mxu0 %v1340
  %1396 = vmatpush.msra.mxu0 %v1336
  %1397 = vmatpush.msra.mxu0 %v1332
  %1398 = vmatpush.msra.mxu0 %v1328
  %1399 = vmatpush.msra.mxu0 %v1324
  %1400 = vmatpush.msra.mxu0 %v1320
  %1401 = vmatpush.msra.mxu0 %v1316
  %1402 = vmatmul.f32.gmra.mxu0 %v1315
  %v1403 = vpop.f32.mrf.mxu0
  %v1404 = vadd.f32 %v1384, %v1403
  %1405 = vdwg.mxu0
  %1406 = vmatpush.msra.mxu0 %v1377
  %1407 = vmatpush.msra.mxu0 %v1373
  %1408 = vmatpush.msra.mxu0 %v1369
  %1409 = vmatpush.msra.mxu0 %v1365
  %1410 = vmatpush.msra.mxu0 %v1361
  %1411 = vmatpush.msra.mxu0 %v1357
  %1412 = vmatpush.msra.mxu0 %v1353
  %1413 = vmatpush.msra.mxu0 %v1349
  %1414 = vmatpush.msra.mxu0 %v1345
  %1415 = vmatpush.msra.mxu0 %v1341
  %1416 = vmatpush.msra.mxu0 %v1337
  %1417 = vmatpush.msra.mxu0 %v1333
  %1418 = vmatpush.msra.mxu0 %v1329
  %1419 = vmatpush.msra.mxu0 %v1325
  %1420 = vmatpush.msra.mxu0 %v1321
  %1421 = vmatpush.msra.mxu0 %v1317
  %1422 = vmatmul.f32.gmra.mxu0 %v1315
  %v1423 = vpop.f32.mrf.mxu0
  %v1424 = vadd.f32 %v1384, %v1423
  %1425 = vdwg.mxu0
  %1426 = vmatpush.msra.mxu0 %v1378
  %1427 = vmatpush.msra.mxu0 %v1374
  %1428 = vmatpush.msra.mxu0 %v1370
  %1429 = vmatpush.msra.mxu0 %v1366
  %1430 = vmatpush.msra.mxu0 %v1362
  %1431 = vmatpush.msra.mxu0 %v1358
  %1432 = vmatpush.msra.mxu0 %v1354
  %1433 = vmatpush.msra.mxu0 %v1350
  %1434 = vmatpush.msra.mxu0 %v1346
  %1435 = vmatpush.msra.mxu0 %v1342
  %1436 = vmatpush.msra.mxu0 %v1338
  %1437 = vmatpush.msra.mxu0 %v1334
  %1438 = vmatpush.msra.mxu0 %v1330
  %1439 = vmatpush.msra.mxu0 %v1326
  %1440 = vmatpush.msra.mxu0 %v1322
  %1441 = vmatpush.msra.mxu0 %v1318
  %1442 = vmatmul.f32.gmra.mxu0 %v1315
  %v1443 = vpop.f32.mrf.mxu0
  %v1444 = vadd.f32 %v1384, %v1443
  %1445 = vdwg.mxu0
  %1446 = vmatpush.msra.mxu0 %v1379
  %1447 = vmatpush.msra.mxu0 %v1375
  %1448 = vmatpush.msra.mxu0 %v1371
  %1449 = vmatpush.msra.mxu0 %v1367
  %1450 = vmatpush.msra.mxu0 %v1363
  %1451 = vmatpush.msra.mxu0 %v1359
  %1452 = vmatpush.msra.mxu0 %v1355
  %1453 = vmatpush.msra.mxu0 %v1351
  %1454 = vmatpush.msra.mxu0 %v1347
  %1455 = vmatpush.msra.mxu0 %v1343
  %1456 = vmatpush.msra.mxu0 %v1339
  %1457 = vmatpush.msra.mxu0 %v1335
  %1458 = vmatpush.msra.mxu0 %v1331
  %1459 = vmatpush.msra.mxu0 %v1327
  %1460 = vmatpush.msra.mxu0 %v1323
  %1461 = vmatpush.msra.mxu0 %v1319
  %1462 = vmatmul.f32.gmra.mxu0 %v1315
  %v1463 = vpop.f32.mrf.mxu0
  %v1464 = vadd.f32 %v1384, %v1463
  %1465 = vdwg.mxu0
  %v1466 = vmax.f32 %v1404, 0.0
  %v1467 = vmax.f32 %v1424, 0.0
  %v1468 = vmax.f32 %v1444, 0.0
  %v1469 = vmax.f32 %v1464, 0.0
  %1470 = vst [vmem:[%s5] sm:$0xff] %v1466
  %1471 = vst [vmem:[%s5 + $0x8] sm:$0xff] %v1467
  %1472 = vst [vmem:[%s5 + $0x10] sm:$0xff] %v1468
  %1473 = vst [vmem:[%s5 + $0x18] sm:$0xff] %v1469
  // Predicated region
  $region22: #{forward.1} parent=0 // pred_check
    _
  $region23: #{forward.1} parent=0 // pred_check_branch
    %1475 = sbr.rel (0) target = $region25
  $region24: #{forward.1} parent=0 // pred_region
    _
  $region25: #{forward.1} parent=0 // pred_fallthru
    _
  // Predicated region
  $region26: #{forward.1} parent=0 // pred_check
    _
  $region27: #{forward.1} parent=0 // pred_check_branch
    %1477 = sbr.rel (0) target = $region29
  $region28: #{forward.1} parent=0 // pred_region
    _
  $region29: #{forward.1} parent=0 // pred_fallthru
    _

</llo_original>
